<compile_context>
chip_gen: v5e
topology: v5e:2x2
jax: 0.10.0
libtpu: 0.0.40
codegen_flags: <defaults>
</compile_context>

<pallas_src>
import numpy as np
import jax
import jax.numpy as jnp
from jax.experimental import pallas as pl
from jax.experimental.pallas import tpu as pltpu

_EPS = 1e-5
_VMEM_LIMIT = 32 << 20


# ----------------------------------------------------------------------------- activations
def _act(x, act):
    if act == "silu":
        return x * (1.0 / (1.0 + jnp.exp(-x)))
    if act == "relu":
        return jnp.maximum(x, 0.0)
    return x


# ----------------------------------------------------------------------------- 1x1 conv kernel
def _pw_kernel(act):
    def kernel(x_ref, w_ref, b_ref, o_ref):
        y = jnp.dot(x_ref[...], w_ref[...], preferred_element_type=jnp.float32)
        o_ref[...] = _act(y + b_ref[...], act).astype(o_ref.dtype)
    return kernel


def pointwise(x2d, w2d, b2d, act="none", tm=2048):
    """act((M, Cin) @ (Cin, Cout) + bias) over row tiles; weights stay VMEM-resident."""
    M, Cin = x2d.shape
    Cout = w2d.shape[1]
    TM = M if M <= tm else tm
    return pl.pallas_call(
        _pw_kernel(act),
        out_shape=jax.ShapeDtypeStruct((M, Cout), x2d.dtype),
        grid_spec=pltpu.PrefetchScalarGridSpec(
            num_scalar_prefetch=0,
            grid=(pl.cdiv(M, TM),),
            in_specs=[
                pl.BlockSpec((TM, Cin), lambda i: (i, 0)),
                pl.BlockSpec((Cin, Cout), lambda i: (0, 0)),
                pl.BlockSpec((1, Cout), lambda i: (0, 0)),
            ],
            out_specs=pl.BlockSpec((TM, Cout), lambda i: (i, 0)),
        ),
        compiler_params=pltpu.CompilerParams(
            dimension_semantics=("parallel",), vmem_limit_bytes=_VMEM_LIMIT),
    )(x2d, w2d, b2d)


# ----------------------------------------------------------------------------- split-weight 1x1 conv kernel
def _pw2_kernel(act):
    def kernel(xa_ref, xb_ref, wa_ref, wb_ref, b_ref, o_ref):
        y = jnp.dot(xa_ref[...], wa_ref[...], preferred_element_type=jnp.float32)
        y = y + jnp.dot(xb_ref[...], wb_ref[...], preferred_element_type=jnp.float32)
        o_ref[...] = _act(y + b_ref[...], act).astype(o_ref.dtype)
    return kernel


def pointwise2(xa, xb, wa, wb, b2d, act="none", tm=2048):
    """act(xa @ wa + xb @ wb + b): channel-concat 1x1 conv without materializing the concat."""
    M, Ca = xa.shape
    Cb = xb.shape[1]
    Cout = wa.shape[1]
    TM = M if M <= tm else tm
    return pl.pallas_call(
        _pw2_kernel(act),
        out_shape=jax.ShapeDtypeStruct((M, Cout), xa.dtype),
        grid_spec=pltpu.PrefetchScalarGridSpec(
            num_scalar_prefetch=0,
            grid=(pl.cdiv(M, TM),),
            in_specs=[
                pl.BlockSpec((TM, Ca), lambda i: (i, 0)),
                pl.BlockSpec((TM, Cb), lambda i: (i, 0)),
                pl.BlockSpec((Ca, Cout), lambda i: (0, 0)),
                pl.BlockSpec((Cb, Cout), lambda i: (0, 0)),
                pl.BlockSpec((1, Cout), lambda i: (0, 0)),
            ],
            out_specs=pl.BlockSpec((TM, Cout), lambda i: (i, 0)),
        ),
        compiler_params=pltpu.CompilerParams(
            dimension_semantics=("parallel",), vmem_limit_bytes=_VMEM_LIMIT),
    )(xa, xb, wa, wb, b2d)


# ----------------------------------------------------------------------------- fused CoT bottleneck kernel
def _make_bottleneck_kernel(H, W, c_):
    """One whole CoTBottleneck per grid step (one image): cv1 -> grouped 3x3 -> value/attention
    embeds -> softmax over HW -> combine + residual, all in VMEM."""
    HW = H * W

    def kernel(xin_ref, cv1w_ref, cv1b_ref, keyw_ref, keyb_ref,
               valw_ref, valb_ref, a1k_ref, a1z_ref, a1b_ref,
               a2w_ref, a2b_ref, o_ref):
        x_full = xin_ref[0].astype(jnp.float32)                  # (HW, Cw)
        x_in = x_full[:, :c_]                                    # residual = first c_ channels

        # bottleneck cv1: 1x1 conv + folded BN + SiLU
        z = jnp.dot(x_in, cv1w_ref[...], preferred_element_type=jnp.float32) + cv1b_ref[...]
        z = z * (1.0 / (1.0 + jnp.exp(-z)))                      # SiLU

        # key_embed: grouped 3x3 conv + BN + ReLU via in-VMEM zero-pad + im2col (one matmul)
        z3 = z.reshape(H, W, c_)
        zr = jnp.zeros((1, W, c_), jnp.float32)
        zc = jnp.zeros((H + 2, 1, c_), jnp.float32)
        zp = jnp.concatenate([zr, z3, zr], axis=0)               # (H+2, W,   c_)
        zp = jnp.concatenate([zc, zp, zc], axis=1)               # (H+2, W+2, c_)
        cols = [zp[dy:dy + H, dx:dx + W, :].reshape(HW, c_)
                for dy in range(3) for dx in range(3)]
        im2col = jnp.concatenate(cols, axis=1)                   # (HW, 9*c_), tap-major
        k1 = jnp.dot(im2col, keyw_ref[...], preferred_element_type=jnp.float32) + keyb_ref[...]
        k1 = jnp.maximum(k1, 0.0)

        # value_embed: 1x1 conv + folded BN
        v = jnp.dot(z, valw_ref[...], preferred_element_type=jnp.float32) + valb_ref[...]

        # attention_embed on cat[k1, z]: relu(1x1+BN) then 1x1 with the 9-tap mean folded in
        hid = (jnp.dot(k1, a1k_ref[...], preferred_element_type=jnp.float32)
               + jnp.dot(z, a1z_ref[...], preferred_element_type=jnp.float32)
               + a1b_ref[...])
        hid = jnp.maximum(hid, 0.0)
        att = jnp.dot(hid, a2w_ref[...], preferred_element_type=jnp.float32) + a2b_ref[...]

        # softmax over the HW axis (per channel), scale v, add k1 and the residual
        mx = jnp.max(att, axis=0, keepdims=True)
        e = jnp.exp(att - mx)
        s = jnp.sum(e, axis=0, keepdims=True)
        inv = pl.reciprocal(s, approx=True)                      # EUP, off the VPU critical path
        out = x_in + k1 + (e * inv) * v
        o_ref[...] = out[None].astype(o_ref.dtype)

    return kernel


def cot_bottleneck(x_in, bp, H, W):
    """x_in: (N, HW, Cw) with the bottleneck input in the first c_ channels. Returns (N, HW, c_)."""
    N, HW, Cw = x_in.shape
    c_ = bp["cv1_b"].shape[1]

    def const2d(a):
        return pl.BlockSpec(a.shape, lambda n: (0, 0))

    return pl.pallas_call(
        _make_bottleneck_kernel(H, W, c_),
        out_shape=jax.ShapeDtypeStruct((N, HW, c_), x_in.dtype),
        grid_spec=pltpu.PrefetchScalarGridSpec(
            num_scalar_prefetch=0,
            grid=(N,),
            in_specs=[
                pl.BlockSpec((1, HW, Cw), lambda n: (n, 0, 0)),
                const2d(bp["cv1_w"]), const2d(bp["cv1_b"]),
                const2d(bp["key_w"]), const2d(bp["key_b"]),
                const2d(bp["val_w"]), const2d(bp["val_b"]),
                const2d(bp["att1_wk"]), const2d(bp["att1_wz"]), const2d(bp["att1_b"]),
                const2d(bp["att2_w"]), const2d(bp["att2_b"]),
            ],
            out_specs=pl.BlockSpec((1, HW, c_), lambda n: (n, 0, 0)),
        ),
        compiler_params=pltpu.CompilerParams(
            dimension_semantics=("parallel",), vmem_limit_bytes=_VMEM_LIMIT),
    )(x_in, bp["cv1_w"], bp["cv1_b"], bp["key_w"], bp["key_b"],
      bp["val_w"], bp["val_b"], bp["att1_wk"], bp["att1_wz"], bp["att1_b"],
      bp["att2_w"], bp["att2_b"])


# ----------------------------------------------------------------------------- host-side param folding
def _fold_bn(w, bn, eps=_EPS):
    g, b, m, v = (np.asarray(t, np.float64) for t in bn)
    scale = g / np.sqrt(v + eps)
    w = np.asarray(w, np.float64)
    wf = w * scale.reshape((-1,) + (1,) * (w.ndim - 1))
    bf = b - m * scale
    return wf, bf


def _prep_1x1(w, bn):
    wf, bf = _fold_bn(w, bn)                     # (Cout, Cin, 1, 1)
    cout, cin = wf.shape[:2]
    return (np.asarray(wf.reshape(cout, cin).T, np.float32),
            np.asarray(bf.reshape(1, cout), np.float32))


def _prep_gconv_im2col(w, bn, groups):
    """Fold BN into the grouped 3x3 conv and lay it out as a (9*C, C) im2col weight
    (row = tap*C + cin_global, block-diagonal per group)."""
    wf, bf = _fold_bn(w, bn)                     # (C, C//G, 3, 3)
    C = wf.shape[0]
    cg = C // groups
    taps = np.zeros((9, C, C), np.float64)       # (tap, cin_global, cout)
    for co in range(C):
        g = co // cg
        taps[:, g * cg:(g + 1) * cg, co] = wf[co].reshape(cg, 9).T
    # TODO(synk): on v5e with C > 128, 4 per-group matmuls would avoid the 75%-zero K dim.
    return (np.asarray(taps.reshape(9 * C, C), np.float32),
            np.asarray(bf.reshape(1, C), np.float32))


def _prep_att2(w, b, c_, ks=3):
    # Fold the mean over the ks*ks taps (att.reshape(bs,c,9,h,w).mean(2)) into weight & bias.
    w = np.asarray(w, np.float64).reshape(c_, ks * ks, -1).mean(axis=1)   # (c_, mid)
    b = np.asarray(b, np.float64).reshape(c_, ks * ks).mean(axis=1)       # (c_,)
    return np.asarray(w.T, np.float32), np.asarray(b.reshape(1, c_), np.float32)


def prepare_cot3_params(params, groups=4, kernel_size=3):
    c_ = int(params["cv1"]["w"].shape[0])
    w1, b1 = _prep_1x1(params["cv1"]["w"], params["cv1"]["bn"])   # (C1, c_)
    w2, b2 = _prep_1x1(params["cv2"]["w"], params["cv2"]["bn"])   # (C1, c_)
    w3, b3 = _prep_1x1(params["cv3"]["w"], params["cv3"]["bn"])   # (2c_, c2)
    wab = np.zeros_like(w3)
    wab[c_:] = w3[c_:]                                            # cv3 weight for the cv2 half
    fp = {
        "cv12_w": jnp.asarray(np.concatenate([w1, w2], axis=1)),  # (C1, 2c_)
        "cv12_b": jnp.asarray(np.concatenate([b1, b2], axis=1)),  # (1, 2c_)
        "cv3_wm": jnp.asarray(w3[:c_]),                           # (c_, c2)   for m
        "cv3_wab": jnp.asarray(wab),                              # (2c_, c2)  for ab (top rows zero)
        "cv3_b": jnp.asarray(b3),
        "m": [],
    }
    for bp in params["m"]:
        cp = bp["cot"]
        cw, cb = _prep_1x1(bp["cv1"]["w"], bp["cv1"]["bn"])
        kw, kb = _prep_gconv_im2col(cp["key_w"], cp["key_bn"], groups)
        vw, vb = _prep_1x1(cp["val_w"], cp["val_bn"])
        wa1, ba1 = _prep_1x1(cp["att1_w"], cp["att1_bn"])          # (2c_, mid)
        a2w, a2b = _prep_att2(cp["att2_w"], cp["att2_b"], c_, kernel_size)
        fp["m"].append({
            "cv1_w": jnp.asarray(cw), "cv1_b": jnp.asarray(cb),
            "key_w": jnp.asarray(kw), "key_b": jnp.asarray(kb),
            "val_w": jnp.asarray(vw), "val_b": jnp.asarray(vb),
            "att1_wk": jnp.asarray(wa1[:c_]), "att1_wz": jnp.asarray(wa1[c_:]),
            "att1_b": jnp.asarray(ba1),
            "att2_w": jnp.asarray(a2w), "att2_b": jnp.asarray(a2b),
        })
    return fp


# ----------------------------------------------------------------------------- CoT3 forward (Pallas)
def cot3_forward(x_nchw, fp):
    N, C1, H, W = x_nchw.shape
    HW = H * W
    M = N * HW
    # TODO(synk): accept/produce NHWC at the module boundary to drop these two transposes.
    x2d = jnp.transpose(x_nchw, (0, 2, 3, 1)).reshape(M, C1)      # channels-last rows

    # cv1 + cv2 merged into one lane-denser pointwise: ab = [silu(cv1(x)) | silu(cv2(x))]
    ab = pointwise(x2d, fp["cv12_w"], fp["cv12_b"], act="silu")   # (M, 2c_)
    c_ = fp["cv12_b"].shape[1] // 2

    # CoTBottleneck chain: one fused pallas_call per bottleneck (grid over images).
    cur = ab.reshape(N, HW, 2 * c_)           # first bottleneck reads cv1 half in-kernel
    for bp in fp["m"]:
        cur = cot_bottleneck(cur, bp, H, W)   # (N, HW, c_)

    # cv3 on cat(m, cv2(x)): split-weight matmul; top rows of cv3_wab are zero so ab's cv1
    # half contributes nothing.
    m2d = cur.reshape(M, c_)
    out2d = pointwise2(m2d, ab, fp["cv3_wm"], fp["cv3_wab"], fp["cv3_b"], act="silu")
    c2 = out2d.shape[1]
    return jnp.transpose(out2d.reshape(N, H, W, c2), (0, 3, 1, 2))


# ----------------------------------------------------------------------------- pure-JAX reference
def _ref_conv(x, w, padding=0, groups=1):
    return jax.lax.conv_general_dilated(
        x, w, window_strides=(1, 1),
        padding=[(padding, padding), (padding, padding)],
        dimension_numbers=("NCHW", "OIHW", "NCHW"),
        feature_group_count=groups,
        precision=jax.lax.Precision.HIGHEST)


def _ref_bn(x, bn, eps=_EPS):
    g, b, m, v = bn
    return (g[None, :, None, None] * (x - m[None, :, None, None])
            / jnp.sqrt(v + eps)[None, :, None, None] + b[None, :, None, None])


def cot3_reference(x, params, kernel_size=3, groups=4):
    def cba(x, p, act):
        y = _ref_bn(_ref_conv(x, p["w"]), p["bn"])
        if act == "silu":
            return y * jax.nn.sigmoid(y)
        return jax.nn.relu(y) if act == "relu" else y

    a = cba(x, params["cv1"], "silu")
    b = cba(x, params["cv2"], "silu")
    m = a
    for bp in params["m"]:
        x_in = m
        z = cba(x_in, bp["cv1"], "silu")
        cp = bp["cot"]
        bs, c, h, w = z.shape
        k1 = jax.nn.relu(_ref_bn(
            _ref_conv(z, cp["key_w"], padding=kernel_size // 2, groups=groups), cp["key_bn"]))
        v = _ref_bn(_ref_conv(z, cp["val_w"]), cp["val_bn"]).reshape(bs, c, -1)
        y = jnp.concatenate([k1, z], axis=1)
        hid = jax.nn.relu(_ref_bn(_ref_conv(y, cp["att1_w"]), cp["att1_bn"]))
        att = _ref_conv(hid, cp["att2_w"]) + cp["att2_b"][None, :, None, None]
        att = att.reshape(bs, c, kernel_size * kernel_size, h, w).mean(axis=2).reshape(bs, c, -1)
        k2 = (jax.nn.softmax(att, axis=-1) * v).reshape(bs, c, h, w)
        m = x_in + (k1 + k2)
    y = jnp.concatenate([m, b], axis=1)
    return cba(y, params["cv3"], "silu")


# ----------------------------------------------------------------------------- parameter init
def init_cot3_params(key, c1, c2, n=1, e=0.5, kernel_size=3, groups=4):
    c_ = int(c2 * e)
    mid = 2 * c_ // 4
    keys = iter(jax.random.split(key, 64))

    def conv_w(shape, scale=0.2):
        return jax.random.normal(next(keys), shape, jnp.float32) * scale

    def bn_p(c):
        return (1.0 + 0.1 * jax.random.normal(next(keys), (c,), jnp.float32),   # gamma
                0.05 * jax.random.normal(next(keys), (c,), jnp.float32),        # beta
                0.05 * jax.random.normal(next(keys), (c,), jnp.float32),        # running mean
                1.0 + 0.1 * jax.random.uniform(next(keys), (c,), jnp.float32))  # running var > 0

    params = {
        "cv1": {"w": conv_w((c_, c1, 1, 1)), "bn": bn_p(c_)},
        "cv2": {"w": conv_w((c_, c1, 1, 1)), "bn": bn_p(c_)},
        "cv3": {"w": conv_w((c2, 2 * c_, 1, 1)), "bn": bn_p(c2)},
        "m": [],
    }
    for _ in range(n):
        params["m"].append({
            "cv1": {"w": conv_w((c_, c_, 1, 1)), "bn": bn_p(c_)},
            "cot": {
                "key_w": conv_w((c_, c_ // groups, kernel_size, kernel_size)),
                "key_bn": bn_p(c_),
                "val_w": conv_w((c_, c_, 1, 1)),
                "val_bn": bn_p(c_),
                "att1_w": conv_w((mid, 2 * c_, 1, 1)),
                "att1_bn": bn_p(mid),
                "att2_w": conv_w((kernel_size * kernel_size * c_, mid, 1, 1)),
                "att2_b": 0.05 * jax.random.normal(next(keys),
                                                   (kernel_size * kernel_size * c_,), jnp.float32),
            },
        })
    return params


if __name__ == "__main__":
    key = jax.random.PRNGKey(0)
    kx, kp = jax.random.split(key)

    N, C1, C2, H, W = 2, 16, 16, 8, 8          # c_ = 8 (divisible by groups=4), mid = 4
    x = jax.random.normal(kx, (N, C1, H, W), dtype=jnp.float32)
    params = init_cot3_params(kp, C1, C2, n=1)
    folded = prepare_cot3_params(params)

    out = jax.jit(cot3_forward)(x, folded)
    out = jax.block_until_ready(out)

    ref = cot3_reference(x, params)
    assert out.shape == (N, C2, H, W), out.shape
    err = float(jnp.max(jnp.abs(out - ref)))
    assert jnp.allclose(out, ref, atol=5e-3, rtol=5e-3), err

    print("KERNEL_OK")
</pallas_src>

<mosaic_0001>
module attributes {stable_mosaic.version = 11 : i64} {
  func.func @kernel(%arg0: i32, %arg1: memref<128x16xf32, #tpu.memory_space<vmem>>, %arg2: memref<16x16xf32, #tpu.memory_space<vmem>>, %arg3: memref<1x16xf32, #tpu.memory_space<vmem>>, %arg4: memref<128x16xf32, #tpu.memory_space<vmem>>) attributes {dimension_semantics = [#tpu.dimension_semantics<parallel>], iteration_bounds = array<i64: 1>, scalar_prefetch = 0 : i64, scratch_operands = 0 : i64, tpu.core_type = #tpu.core_type<tc>, window_params = [{transform_indices = @transform_0, window_bounds = array<i64: 128, 16>}, {pipeline_mode = #tpu.pipeline_mode<synchronous>, transform_indices = @transform_1, window_bounds = array<i64: 16, 16>}, {pipeline_mode = #tpu.pipeline_mode<synchronous>, transform_indices = @transform_2, window_bounds = array<i64: 1, 16>}, {transform_indices = @transform_3, window_bounds = array<i64: 128, 16>}]} {
    %c0 = arith.constant 0 : index
    %c0_0 = arith.constant 0 : index
    %0 = vector.load %arg1[%c0, %c0_0] : memref<128x16xf32, #tpu.memory_space<vmem>>, vector<128x16xf32>
    %c0_1 = arith.constant 0 : index
    %c0_2 = arith.constant 0 : index
    %1 = vector.load %arg2[%c0_1, %c0_2] : memref<16x16xf32, #tpu.memory_space<vmem>>, vector<16x16xf32>
    %cst = arith.constant dense<0.000000e+00> : vector<128x16xf32>
    %2 = tpu.matmul %0, %1, %cst {dimension_numbers = #tpu.dot_dimension_numbers<[1], [0], [0], [1], [0, 0, 1, 1], [], []>} : vector<128x16xf32>, vector<16x16xf32>, vector<128x16xf32> -> vector<128x16xf32>
    %c0_3 = arith.constant 0 : index
    %c0_4 = arith.constant 0 : index
    %3 = vector.load %arg3[%c0_3, %c0_4] : memref<1x16xf32, #tpu.memory_space<vmem>>, vector<1x16xf32>
    %4 = vector.broadcast %3 : vector<1x16xf32> to vector<128x16xf32>
    %5 = arith.addf %2, %4 : vector<128x16xf32>
    %cst_5 = arith.constant 0.000000e+00 : f32
    %6 = vector.broadcast %cst_5 : f32 to vector<128x16xf32>
    %7 = arith.subf %6, %5 : vector<128x16xf32>
    %8 = math.exp %7 : vector<128x16xf32>
    %cst_6 = arith.constant 1.000000e+00 : f32
    %9 = vector.broadcast %cst_6 : f32 to vector<128x16xf32>
    %10 = arith.addf %9, %8 : vector<128x16xf32>
    %cst_7 = arith.constant 1.000000e+00 : f32
    %11 = vector.broadcast %cst_7 : f32 to vector<128x16xf32>
    %12 = arith.divf %11, %10 : vector<128x16xf32>
    %13 = arith.mulf %5, %12 : vector<128x16xf32>
    %c0_8 = arith.constant 0 : index
    %c0_9 = arith.constant 0 : index
    %14 = vector.load %arg4[%c0_8, %c0_9] : memref<128x16xf32, #tpu.memory_space<vmem>>, vector<128x16xf32>
    tpu.vector_store %arg4[%c0_8, %c0_9], %13 {strides = array<i32>} : memref<128x16xf32, #tpu.memory_space<vmem>>, vector<128x16xf32>,
    return
  }
  func.func @transform_0(%arg0: i32) -> (i32, i32) {
    %c0_i32 = arith.constant 0 : i32
    %c0_i32_0 = arith.constant 0 : i32
    return %arg0, %c0_i32 : i32, i32
  }
  func.func @transform_1(%arg0: i32) -> (i32, i32) {
    %c0_i32 = arith.constant 0 : i32
    %c0_i32_0 = arith.constant 0 : i32
    %c0_i32_1 = arith.constant 0 : i32
    return %c0_i32, %c0_i32_0 : i32, i32
  }
  func.func @transform_2(%arg0: i32) -> (i32, i32) {
    %c0_i32 = arith.constant 0 : i32
    %c0_i32_0 = arith.constant 0 : i32
    %c0_i32_1 = arith.constant 0 : i32
    return %c0_i32, %c0_i32_0 : i32, i32
  }
  func.func @transform_3(%arg0: i32) -> (i32, i32) {
    %c0_i32 = arith.constant 0 : i32
    %c0_i32_0 = arith.constant 0 : i32
    return %arg0, %c0_i32 : i32, i32
  }
}

module attributes {stable_mosaic.version = 11 : i64} {
  func.func @kernel(%arg0: i32, %arg1: memref<1x64x16xf32, #tpu.memory_space<vmem>>, %arg2: memref<8x8xf32, #tpu.memory_space<vmem>>, %arg3: memref<1x8xf32, #tpu.memory_space<vmem>>, %arg4: memref<72x8xf32, #tpu.memory_space<vmem>>, %arg5: memref<1x8xf32, #tpu.memory_space<vmem>>, %arg6: memref<8x8xf32, #tpu.memory_space<vmem>>, %arg7: memref<1x8xf32, #tpu.memory_space<vmem>>, %arg8: memref<8x4xf32, #tpu.memory_space<vmem>>, %arg9: memref<8x4xf32, #tpu.memory_space<vmem>>, %arg10: memref<1x4xf32, #tpu.memory_space<vmem>>, %arg11: memref<4x8xf32, #tpu.memory_space<vmem>>, %arg12: memref<1x8xf32, #tpu.memory_space<vmem>>, %arg13: memref<1x64x8xf32, #tpu.memory_space<vmem>>) attributes {dimension_semantics = [#tpu.dimension_semantics<parallel>], iteration_bounds = array<i64: 2>, scalar_prefetch = 0 : i64, scratch_operands = 0 : i64, tpu.core_type = #tpu.core_type<tc>, window_params = [{transform_indices = @transform_0, window_bounds = array<i64: 1, 64, 16>}, {pipeline_mode = #tpu.pipeline_mode<synchronous>, transform_indices = @transform_1, window_bounds = array<i64: 8, 8>}, {pipeline_mode = #tpu.pipeline_mode<synchronous>, transform_indices = @transform_2, window_bounds = array<i64: 1, 8>}, {pipeline_mode = #tpu.pipeline_mode<synchronous>, transform_indices = @transform_3, window_bounds = array<i64: 72, 8>}, {pipeline_mode = #tpu.pipeline_mode<synchronous>, transform_indices = @transform_4, window_bounds = array<i64: 1, 8>}, {pipeline_mode = #tpu.pipeline_mode<synchronous>, transform_indices = @transform_5, window_bounds = array<i64: 8, 8>}, {pipeline_mode = #tpu.pipeline_mode<synchronous>, transform_indices = @transform_6, window_bounds = array<i64: 1, 8>}, {pipeline_mode = #tpu.pipeline_mode<synchronous>, transform_indices = @transform_7, window_bounds = array<i64: 8, 4>}, {pipeline_mode = #tpu.pipeline_mode<synchronous>, transform_indices = @transform_8, window_bounds = array<i64: 8, 4>}, {pipeline_mode = #tpu.pipeline_mode<synchronous>, transform_indices = @transform_9, window_bounds = array<i64: 1, 4>}, {pipeline_mode = #tpu.pipeline_mode<synchronous>, transform_indices = @transform_10, window_bounds = array<i64: 4, 8>}, {pipeline_mode = #tpu.pipeline_mode<synchronous>, transform_indices = @transform_11, window_bounds = array<i64: 1, 8>}, {transform_indices = @transform_12, window_bounds = array<i64: 1, 64, 8>}]} {
    %c0 = arith.constant 0 : index
    %c0_0 = arith.constant 0 : index
    %c0_1 = arith.constant 0 : index
    %0 = vector.load %arg1[%c0, %c0_0, %c0_1] : memref<1x64x16xf32, #tpu.memory_space<vmem>>, vector<1x64x16xf32>
    %1 = vector.shape_cast %0 : vector<1x64x16xf32> to vector<64x16xf32>
    %2 = vector.extract_strided_slice %1 {offsets = [0, 0], sizes = [64, 8], strides = [1, 1]} : vector<64x16xf32> to vector<64x8xf32>
    %c0_2 = arith.constant 0 : index
    %c0_3 = arith.constant 0 : index
    %3 = vector.load %arg2[%c0_2, %c0_3] : memref<8x8xf32, #tpu.memory_space<vmem>>, vector<8x8xf32>
    %cst = arith.constant dense<0.000000e+00> : vector<64x8xf32>
    %4 = tpu.matmul %2, %3, %cst {dimension_numbers = #tpu.dot_dimension_numbers<[1], [0], [0], [1], [0, 0, 1, 1], [], []>} : vector<64x8xf32>, vector<8x8xf32>, vector<64x8xf32> -> vector<64x8xf32>
    %c0_4 = arith.constant 0 : index
    %c0_5 = arith.constant 0 : index
    %5 = vector.load %arg3[%c0_4, %c0_5] : memref<1x8xf32, #tpu.memory_space<vmem>>, vector<1x8xf32>
    %6 = vector.broadcast %5 : vector<1x8xf32> to vector<64x8xf32>
    %7 = arith.addf %4, %6 : vector<64x8xf32>
    %cst_6 = arith.constant 0.000000e+00 : f32
    %8 = vector.broadcast %cst_6 : f32 to vector<64x8xf32>
    %9 = arith.subf %8, %7 : vector<64x8xf32>
    %10 = math.exp %9 : vector<64x8xf32>
    %cst_7 = arith.constant 1.000000e+00 : f32
    %11 = vector.broadcast %cst_7 : f32 to vector<64x8xf32>
    %12 = arith.addf %11, %10 : vector<64x8xf32>
    %cst_8 = arith.constant 1.000000e+00 : f32
    %13 = vector.broadcast %cst_8 : f32 to vector<64x8xf32>
    %14 = arith.divf %13, %12 : vector<64x8xf32>
    %15 = arith.mulf %7, %14 : vector<64x8xf32>
    %16 = vector.shape_cast %15 : vector<64x8xf32> to vector<8x8x8xf32>
    %cst_9 = arith.constant 0.000000e+00 : f32
    %17 = vector.broadcast %cst_9 : f32 to vector<1x8x8xf32>
    %cst_10 = arith.constant 0.000000e+00 : f32
    %18 = vector.broadcast %cst_10 : f32 to vector<10x1x8xf32>
    %19 = tpu.concatenate %17, %16, %17 in 0 : vector<1x8x8xf32>, vector<8x8x8xf32>, vector<1x8x8xf32> -> vector<10x8x8xf32>
    %20 = tpu.concatenate %18, %19, %18 in 1 : vector<10x1x8xf32>, vector<10x8x8xf32>, vector<10x1x8xf32> -> vector<10x10x8xf32>
    %21 = vector.extract_strided_slice %20 {offsets = [0, 0, 0], sizes = [8, 8, 8], strides = [1, 1, 1]} : vector<10x10x8xf32> to vector<8x8x8xf32>
    %22 = vector.shape_cast %21 : vector<8x8x8xf32> to vector<64x8xf32>
    %23 = vector.extract_strided_slice %20 {offsets = [0, 1, 0], sizes = [8, 8, 8], strides = [1, 1, 1]} : vector<10x10x8xf32> to vector<8x8x8xf32>
    %24 = vector.shape_cast %23 : vector<8x8x8xf32> to vector<64x8xf32>
    %25 = vector.extract_strided_slice %20 {offsets = [0, 2, 0], sizes = [8, 8, 8], strides = [1, 1, 1]} : vector<10x10x8xf32> to vector<8x8x8xf32>
    %26 = vector.shape_cast %25 : vector<8x8x8xf32> to vector<64x8xf32>
    %27 = vector.extract_strided_slice %20 {offsets = [1, 0, 0], sizes = [8, 8, 8], strides = [1, 1, 1]} : vector<10x10x8xf32> to vector<8x8x8xf32>
    %28 = vector.shape_cast %27 : vector<8x8x8xf32> to vector<64x8xf32>
    %29 = vector.extract_strided_slice %20 {offsets = [1, 1, 0], sizes = [8, 8, 8], strides = [1, 1, 1]} : vector<10x10x8xf32> to vector<8x8x8xf32>
    %30 = vector.shape_cast %29 : vector<8x8x8xf32> to vector<64x8xf32>
    %31 = vector.extract_strided_slice %20 {offsets = [1, 2, 0], sizes = [8, 8, 8], strides = [1, 1, 1]} : vector<10x10x8xf32> to vector<8x8x8xf32>
    %32 = vector.shape_cast %31 : vector<8x8x8xf32> to vector<64x8xf32>
    %33 = vector.extract_strided_slice %20 {offsets = [2, 0, 0], sizes = [8, 8, 8], strides = [1, 1, 1]} : vector<10x10x8xf32> to vector<8x8x8xf32>
    %34 = vector.shape_cast %33 : vector<8x8x8xf32> to vector<64x8xf32>
    %35 = vector.extract_strided_slice %20 {offsets = [2, 1, 0], sizes = [8, 8, 8], strides = [1, 1, 1]} : vector<10x10x8xf32> to vector<8x8x8xf32>
    %36 = vector.shape_cast %35 : vector<8x8x8xf32> to vector<64x8xf32>
    %37 = vector.extract_strided_slice %20 {offsets = [2, 2, 0], sizes = [8, 8, 8], strides = [1, 1, 1]} : vector<10x10x8xf32> to vector<8x8x8xf32>
    %38 = vector.shape_cast %37 : vector<8x8x8xf32> to vector<64x8xf32>
    %39 = tpu.concatenate %22, %24, %26, %28, %30, %32, %34, %36, %38 in 1 : vector<64x8xf32>, vector<64x8xf32>, vector<64x8xf32>, vector<64x8xf32>, vector<64x8xf32>, vector<64x8xf32>, vector<64x8xf32>, vector<64x8xf32>, vector<64x8xf32> -> vector<64x72xf32>
    %c0_11 = arith.constant 0 : index
    %c0_12 = arith.constant 0 : index
    %40 = vector.load %arg4[%c0_11, %c0_12] : memref<72x8xf32, #tpu.memory_space<vmem>>, vector<72x8xf32>
    %cst_13 = arith.constant dense<0.000000e+00> : vector<64x8xf32>
    %41 = tpu.matmul %39, %40, %cst_13 {dimension_numbers = #tpu.dot_dimension_numbers<[1], [0], [0], [1], [0, 0, 1, 1], [], []>} : vector<64x72xf32>, vector<72x8xf32>, vector<64x8xf32> -> vector<64x8xf32>
    %c0_14 = arith.constant 0 : index
    %c0_15 = arith.constant 0 : index
    %42 = vector.load %arg5[%c0_14, %c0_15] : memref<1x8xf32, #tpu.memory_space<vmem>>, vector<1x8xf32>
    %43 = vector.broadcast %42 : vector<1x8xf32> to vector<64x8xf32>
    %44 = arith.addf %41, %43 : vector<64x8xf32>
    %cst_16 = arith.constant 0.000000e+00 : f32
    %45 = vector.broadcast %cst_16 : f32 to vector<64x8xf32>
    %46 = arith.maximumf %44, %45 : vector<64x8xf32>
    %c0_17 = arith.constant 0 : index
    %c0_18 = arith.constant 0 : index
    %47 = vector.load %arg6[%c0_17, %c0_18] : memref<8x8xf32, #tpu.memory_space<vmem>>, vector<8x8xf32>
    %cst_19 = arith.constant dense<0.000000e+00> : vector<64x8xf32>
    %48 = tpu.matmul %15, %47, %cst_19 {dimension_numbers = #tpu.dot_dimension_numbers<[1], [0], [0], [1], [0, 0, 1, 1], [], []>} : vector<64x8xf32>, vector<8x8xf32>, vector<64x8xf32> -> vector<64x8xf32>
    %c0_20 = arith.constant 0 : index
    %c0_21 = arith.constant 0 : index
    %49 = vector.load %arg7[%c0_20, %c0_21] : memref<1x8xf32, #tpu.memory_space<vmem>>, vector<1x8xf32>
    %50 = vector.broadcast %49 : vector<1x8xf32> to vector<64x8xf32>
    %51 = arith.addf %48, %50 : vector<64x8xf32>
    %c0_22 = arith.constant 0 : index
    %c0_23 = arith.constant 0 : index
    %52 = vector.load %arg8[%c0_22, %c0_23] : memref<8x4xf32, #tpu.memory_space<vmem>>, vector<8x4xf32>
    %cst_24 = arith.constant dense<0.000000e+00> : vector<64x4xf32>
    %53 = tpu.matmul %46, %52, %cst_24 {dimension_numbers = #tpu.dot_dimension_numbers<[1], [0], [0], [1], [0, 0, 1, 1], [], []>} : vector<64x8xf32>, vector<8x4xf32>, vector<64x4xf32> -> vector<64x4xf32>
    %c0_25 = arith.constant 0 : index
    %c0_26 = arith.constant 0 : index
    %54 = vector.load %arg9[%c0_25, %c0_26] : memref<8x4xf32, #tpu.memory_space<vmem>>, vector<8x4xf32>
    %cst_27 = arith.constant dense<0.000000e+00> : vector<64x4xf32>
    %55 = tpu.matmul %15, %54, %cst_27 {dimension_numbers = #tpu.dot_dimension_numbers<[1], [0], [0], [1], [0, 0, 1, 1], [], []>} : vector<64x8xf32>, vector<8x4xf32>, vector<64x4xf32> -> vector<64x4xf32>
    %56 = arith.addf %53, %55 : vector<64x4xf32>
    %c0_28 = arith.constant 0 : index
    %c0_29 = arith.constant 0 : index
    %57 = vector.load %arg10[%c0_28, %c0_29] : memref<1x4xf32, #tpu.memory_space<vmem>>, vector<1x4xf32>
    %58 = vector.broadcast %57 : vector<1x4xf32> to vector<64x4xf32>
    %59 = arith.addf %56, %58 : vector<64x4xf32>
    %cst_30 = arith.constant 0.000000e+00 : f32
    %60 = vector.broadcast %cst_30 : f32 to vector<64x4xf32>
    %61 = arith.maximumf %59, %60 : vector<64x4xf32>
    %c0_31 = arith.constant 0 : index
    %c0_32 = arith.constant 0 : index
    %62 = vector.load %arg11[%c0_31, %c0_32] : memref<4x8xf32, #tpu.memory_space<vmem>>, vector<4x8xf32>
    %cst_33 = arith.constant dense<0.000000e+00> : vector<64x8xf32>
    %63 = tpu.matmul %61, %62, %cst_33 {dimension_numbers = #tpu.dot_dimension_numbers<[1], [0], [0], [1], [0, 0, 1, 1], [], []>} : vector<64x4xf32>, vector<4x8xf32>, vector<64x8xf32> -> vector<64x8xf32>
    %c0_34 = arith.constant 0 : index
    %c0_35 = arith.constant 0 : index
    %64 = vector.load %arg12[%c0_34, %c0_35] : memref<1x8xf32, #tpu.memory_space<vmem>>, vector<1x8xf32>
    %65 = vector.broadcast %64 : vector<1x8xf32> to vector<64x8xf32>
    %66 = arith.addf %63, %65 : vector<64x8xf32>
    %cst_36 = arith.constant dense<0xFF800000> : vector<8xf32>
    %67 = vector.multi_reduction <maximumf>, %66, %cst_36 [0] : vector<64x8xf32> to vector<8xf32>
    %68 = vector.shape_cast %67 : vector<8xf32> to vector<1x8xf32>
    %69 = vector.broadcast %68 : vector<1x8xf32> to vector<64x8xf32>
    %70 = arith.subf %66, %69 : vector<64x8xf32>
    %71 = math.exp %70 : vector<64x8xf32>
    %cst_37 = arith.constant dense<0.000000e+00> : vector<8xf32>
    %72 = vector.multi_reduction <add>, %71, %cst_37 [0] : vector<64x8xf32> to vector<8xf32>
    %73 = vector.shape_cast %72 : vector<8xf32> to vector<1x8xf32>
    %74 = tpu.reciprocal %73 {approx = true} : vector<1x8xf32> -> vector<1x8xf32>
    %75 = arith.addf %2, %46 : vector<64x8xf32>
    %76 = vector.broadcast %74 : vector<1x8xf32> to vector<64x8xf32>
    %77 = arith.mulf %71, %76 : vector<64x8xf32>
    %78 = arith.mulf %77, %51 : vector<64x8xf32>
    %79 = arith.addf %75, %78 : vector<64x8xf32>
    %80 = vector.shape_cast %79 : vector<64x8xf32> to vector<1x64x8xf32>
    %c0_38 = arith.constant 0 : index
    %c0_39 = arith.constant 0 : index
    %c0_40 = arith.constant 0 : index
    %81 = vector.load %arg13[%c0_38, %c0_39, %c0_40] : memref<1x64x8xf32, #tpu.memory_space<vmem>>, vector<1x64x8xf32>
    tpu.vector_store %arg13[%c0_38, %c0_39, %c0_40], %80 {strides = array<i32>} : memref<1x64x8xf32, #tpu.memory_space<vmem>>, vector<1x64x8xf32>,
    return
  }
  func.func @transform_0(%arg0: i32) -> (i32, i32, i32) {
    %c0_i32 = arith.constant 0 : i32
    %c0_i32_0 = arith.constant 0 : i32
    %c0_i32_1 = arith.constant 0 : i32
    return %arg0, %c0_i32, %c0_i32_0 : i32, i32, i32
  }
  func.func @transform_1(%arg0: i32) -> (i32, i32) {
    %c0_i32 = arith.constant 0 : i32
    %c0_i32_0 = arith.constant 0 : i32
    %c0_i32_1 = arith.constant 0 : i32
    return %c0_i32, %c0_i32_0 : i32, i32
  }
  func.func @transform_2(%arg0: i32) -> (i32, i32) {
    %c0_i32 = arith.constant 0 : i32
    %c0_i32_0 = arith.constant 0 : i32
    %c0_i32_1 = arith.constant 0 : i32
    return %c0_i32, %c0_i32_0 : i32, i32
  }
  func.func @transform_3(%arg0: i32) -> (i32, i32) {
    %c0_i32 = arith.constant 0 : i32
    %c0_i32_0 = arith.constant 0 : i32
    %c0_i32_1 = arith.constant 0 : i32
    return %c0_i32, %c0_i32_0 : i32, i32
  }
  func.func @transform_4(%arg0: i32) -> (i32, i32) {
    %c0_i32 = arith.constant 0 : i32
    %c0_i32_0 = arith.constant 0 : i32
    %c0_i32_1 = arith.constant 0 : i32
    return %c0_i32, %c0_i32_0 : i32, i32
  }
  func.func @transform_5(%arg0: i32) -> (i32, i32) {
    %c0_i32 = arith.constant 0 : i32
    %c0_i32_0 = arith.constant 0 : i32
    %c0_i32_1 = arith.constant 0 : i32
    return %c0_i32, %c0_i32_0 : i32, i32
  }
  func.func @transform_6(%arg0: i32) -> (i32, i32) {
    %c0_i32 = arith.constant 0 : i32
    %c0_i32_0 = arith.constant 0 : i32
    %c0_i32_1 = arith.constant 0 : i32
    return %c0_i32, %c0_i32_0 : i32, i32
  }
  func.func @transform_7(%arg0: i32) -> (i32, i32) {
    %c0_i32 = arith.constant 0 : i32
    %c0_i32_0 = arith.constant 0 : i32
    %c0_i32_1 = arith.constant 0 : i32
    return %c0_i32, %c0_i32_0 : i32, i32
  }
  func.func @transform_8(%arg0: i32) -> (i32, i32) {
    %c0_i32 = arith.constant 0 : i32
    %c0_i32_0 = arith.constant 0 : i32
    %c0_i32_1 = arith.constant 0 : i32
    return %c0_i32, %c0_i32_0 : i32, i32
  }
  func.func @transform_9(%arg0: i32) -> (i32, i32) {
    %c0_i32 = arith.constant 0 : i32
    %c0_i32_0 = arith.constant 0 : i32
    %c0_i32_1 = arith.constant 0 : i32
    return %c0_i32, %c0_i32_0 : i32, i32
  }
  func.func @transform_10(%arg0: i32) -> (i32, i32) {
    %c0_i32 = arith.constant 0 : i32
    %c0_i32_0 = arith.constant 0 : i32
    %c0_i32_1 = arith.constant 0 : i32
    return %c0_i32, %c0_i32_0 : i32, i32
  }
  func.func @transform_11(%arg0: i32) -> (i32, i32) {
    %c0_i32 = arith.constant 0 : i32
    %c0_i32_0 = arith.constant 0 : i32
    %c0_i32_1 = arith.constant 0 : i32
    return %c0_i32, %c0_i32_0 : i32, i32
  }
  func.func @transform_12(%arg0: i32) -> (i32, i32, i32) {
    %c0_i32 = arith.constant 0 : i32
    %c0_i32_0 = arith.constant 0 : i32
    %c0_i32_1 = arith.constant 0 : i32
    return %arg0, %c0_i32, %c0_i32_0 : i32, i32, i32
  }
}

module attributes {stable_mosaic.version = 11 : i64} {
  func.func @kernel(%arg0: i32, %arg1: memref<128x8xf32, #tpu.memory_space<vmem>>, %arg2: memref<128x16xf32, #tpu.memory_space<vmem>>, %arg3: memref<8x16xf32, #tpu.memory_space<vmem>>, %arg4: memref<16x16xf32, #tpu.memory_space<vmem>>, %arg5: memref<1x16xf32, #tpu.memory_space<vmem>>, %arg6: memref<128x16xf32, #tpu.memory_space<vmem>>) attributes {dimension_semantics = [#tpu.dimension_semantics<parallel>], iteration_bounds = array<i64: 1>, scalar_prefetch = 0 : i64, scratch_operands = 0 : i64, tpu.core_type = #tpu.core_type<tc>, window_params = [{transform_indices = @transform_0, window_bounds = array<i64: 128, 8>}, {transform_indices = @transform_1, window_bounds = array<i64: 128, 16>}, {pipeline_mode = #tpu.pipeline_mode<synchronous>, transform_indices = @transform_2, window_bounds = array<i64: 8, 16>}, {pipeline_mode = #tpu.pipeline_mode<synchronous>, transform_indices = @transform_3, window_bounds = array<i64: 16, 16>}, {pipeline_mode = #tpu.pipeline_mode<synchronous>, transform_indices = @transform_4, window_bounds = array<i64: 1, 16>}, {transform_indices = @transform_5, window_bounds = array<i64: 128, 16>}]} {
    %c0 = arith.constant 0 : index
    %c0_0 = arith.constant 0 : index
    %0 = vector.load %arg1[%c0, %c0_0] : memref<128x8xf32, #tpu.memory_space<vmem>>, vector<128x8xf32>
    %c0_1 = arith.constant 0 : index
    %c0_2 = arith.constant 0 : index
    %1 = vector.load %arg3[%c0_1, %c0_2] : memref<8x16xf32, #tpu.memory_space<vmem>>, vector<8x16xf32>
    %cst = arith.constant dense<0.000000e+00> : vector<128x16xf32>
    %2 = tpu.matmul %0, %1, %cst {dimension_numbers = #tpu.dot_dimension_numbers<[1], [0], [0], [1], [0, 0, 1, 1], [], []>} : vector<128x8xf32>, vector<8x16xf32>, vector<128x16xf32> -> vector<128x16xf32>
    %c0_3 = arith.constant 0 : index
    %c0_4 = arith.constant 0 : index
    %3 = vector.load %arg2[%c0_3, %c0_4] : memref<128x16xf32, #tpu.memory_space<vmem>>, vector<128x16xf32>
    %c0_5 = arith.constant 0 : index
    %c0_6 = arith.constant 0 : index
    %4 = vector.load %arg4[%c0_5, %c0_6] : memref<16x16xf32, #tpu.memory_space<vmem>>, vector<16x16xf32>
    %cst_7 = arith.constant dense<0.000000e+00> : vector<128x16xf32>
    %5 = tpu.matmul %3, %4, %cst_7 {dimension_numbers = #tpu.dot_dimension_numbers<[1], [0], [0], [1], [0, 0, 1, 1], [], []>} : vector<128x16xf32>, vector<16x16xf32>, vector<128x16xf32> -> vector<128x16xf32>
    %6 = arith.addf %2, %5 : vector<128x16xf32>
    %c0_8 = arith.constant 0 : index
    %c0_9 = arith.constant 0 : index
    %7 = vector.load %arg5[%c0_8, %c0_9] : memref<1x16xf32, #tpu.memory_space<vmem>>, vector<1x16xf32>
    %8 = vector.broadcast %7 : vector<1x16xf32> to vector<128x16xf32>
    %9 = arith.addf %6, %8 : vector<128x16xf32>
    %cst_10 = arith.constant 0.000000e+00 : f32
    %10 = vector.broadcast %cst_10 : f32 to vector<128x16xf32>
    %11 = arith.subf %10, %9 : vector<128x16xf32>
    %12 = math.exp %11 : vector<128x16xf32>
    %cst_11 = arith.constant 1.000000e+00 : f32
    %13 = vector.broadcast %cst_11 : f32 to vector<128x16xf32>
    %14 = arith.addf %13, %12 : vector<128x16xf32>
    %cst_12 = arith.constant 1.000000e+00 : f32
    %15 = vector.broadcast %cst_12 : f32 to vector<128x16xf32>
    %16 = arith.divf %15, %14 : vector<128x16xf32>
    %17 = arith.mulf %9, %16 : vector<128x16xf32>
    %c0_13 = arith.constant 0 : index
    %c0_14 = arith.constant 0 : index
    %18 = vector.load %arg6[%c0_13, %c0_14] : memref<128x16xf32, #tpu.memory_space<vmem>>, vector<128x16xf32>
    tpu.vector_store %arg6[%c0_13, %c0_14], %17 {strides = array<i32>} : memref<128x16xf32, #tpu.memory_space<vmem>>, vector<128x16xf32>,
    return
  }
  func.func @transform_0(%arg0: i32) -> (i32, i32) {
    %c0_i32 = arith.constant 0 : i32
    %c0_i32_0 = arith.constant 0 : i32
    return %arg0, %c0_i32 : i32, i32
  }
  func.func @transform_1(%arg0: i32) -> (i32, i32) {
    %c0_i32 = arith.constant 0 : i32
    %c0_i32_0 = arith.constant 0 : i32
    return %arg0, %c0_i32 : i32, i32
  }
  func.func @transform_2(%arg0: i32) -> (i32, i32) {
    %c0_i32 = arith.constant 0 : i32
    %c0_i32_0 = arith.constant 0 : i32
    %c0_i32_1 = arith.constant 0 : i32
    return %c0_i32, %c0_i32_0 : i32, i32
  }
  func.func @transform_3(%arg0: i32) -> (i32, i32) {
    %c0_i32 = arith.constant 0 : i32
    %c0_i32_0 = arith.constant 0 : i32
    %c0_i32_1 = arith.constant 0 : i32
    return %c0_i32, %c0_i32_0 : i32, i32
  }
  func.func @transform_4(%arg0: i32) -> (i32, i32) {
    %c0_i32 = arith.constant 0 : i32
    %c0_i32_0 = arith.constant 0 : i32
    %c0_i32_1 = arith.constant 0 : i32
    return %c0_i32, %c0_i32_0 : i32, i32
  }
  func.func @transform_5(%arg0: i32) -> (i32, i32) {
    %c0_i32 = arith.constant 0 : i32
    %c0_i32_0 = arith.constant 0 : i32
    return %arg0, %c0_i32 : i32, i32
  }
}

</mosaic_0001>

<llo_original>
// kernel: cot3_forward.3
$region0: #{cot3_forward.3}
  #allocation0 [shape = 'u32[]', space=smem, size = 0x4, offset = 0x4, fixed_abs, tag = 'smem constant byte address 0x4 - core index']
  #allocation1 [shape = 'u32[72,128]{1,0:T(1,128)}', space=vmem, size = 0x9000, scoped, tag = 'internal scratch']
  %s0 = inlined_call_operand.hbm [shape: f32[128,16], index: 0, kind: input, shape index: {}]
  %s1 = inlined_call_operand.vmem [shape: f32[16,16], index: 1, kind: input, shape index: {}]
  %s2 = inlined_call_operand.vmem [shape: f32[1,16], index: 2, kind: input, shape index: {}]
  %s3 = inlined_call_operand.vmem [shape: f32[128,16], index: 3, kind: output, shape index: {}]
  %s4 = sld [smem:[#allocation0]]
  $region26: #{cot3_forward.3} parent=0
    _
  %s6 = ssub.s32 1, %s4
  %s7 = scalar_select 0, %s6, %s4
  $region1: #{cot3_forward.3} parent=0
    #allocation2 [shape = 'u8[65536]{0}', space=vmem, size = 0x10000, scoped, tag = 'input window, operand 0, single buffered']
    #allocation3 [shape = 's32[1]{0}', space=sflag, size = 0x4, scoped, tag = 'scoped memory for cot3_forward.3']
    %8 = vsyncpa [#allocation3], 0
    // Predicated region
    $region2: #{cot3_forward.3} parent=1 // pred_check
      _
    $region3: #{cot3_forward.3} parent=1 // pred_check_branch
      %10 = sbr.rel (0) target = $region5
    $region4: #{cot3_forward.3} parent=1 // pred_region
      %12 = vsyncadd [#allocation3], 0
      %s13 = sshll.u32 %s0, 4
      %s14 = int_to_ptr.hbm [resolvable:$true] %s13
      %s15 = sshll.u32 [#allocation2], 4
      %s16 = int_to_ptr.vmem [resolvable:$true] %s15
      %21 = dma.hbm_to_vmem [thread:$0]  %s14, 2048, %s16, [#allocation3], 128, 128, 8
    $region5: #{cot3_forward.3} parent=1 // pred_fallthru
      _
    // Predicated region
    $region6: #{cot3_forward.3} parent=1 // pred_check
      _
    $region7: #{cot3_forward.3} parent=1 // pred_check_branch
      %23 = sbr.rel (0) target = $region9
    $region8: #{cot3_forward.3} parent=1 // pred_region
      _
    $region9: #{cot3_forward.3} parent=1 // pred_fallthru
      _
    // Predicated region
    $region10: #{cot3_forward.3} parent=1 // pred_check
      _
    $region11: #{cot3_forward.3} parent=1 // pred_check_branch
      %25 = sbr.rel (0) target = $region13
    $region12: #{cot3_forward.3} parent=1 // pred_region
      _
    $region13: #{cot3_forward.3} parent=1 // pred_fallthru
      _
    // Predicated region
    $region14: #{cot3_forward.3} parent=1 // pred_check
      _
    $region15: #{cot3_forward.3} parent=1 // pred_check_branch
      %27 = sbr.rel (0) target = $region17
    $region16: #{cot3_forward.3} parent=1 // pred_region
      %29 = dma.done [#allocation3], 2048
    $region17: #{cot3_forward.3} parent=1 // pred_fallthru
      _
    %v30 = vld [vmem:[#allocation2] sm:$0xff]
    %v31 = vld [vmem:[#allocation2 + $0x8] sm:$0xff]
    %v32 = vld [vmem:[#allocation2 + $0x10] sm:$0xff]
    %v33 = vld [vmem:[#allocation2 + $0x18] sm:$0xff]
    %v34 = vld [vmem:[#allocation2 + $0x20] sm:$0xff]
    %v35 = vld [vmem:[#allocation2 + $0x28] sm:$0xff]
    %v36 = vld [vmem:[#allocation2 + $0x30] sm:$0xff]
    %v37 = vld [vmem:[#allocation2 + $0x38] sm:$0xff]
    %v38 = vld [vmem:[#allocation2 + $0x40] sm:$0xff]
    %v39 = vld [vmem:[#allocation2 + $0x48] sm:$0xff]
    %v40 = vld [vmem:[#allocation2 + $0x50] sm:$0xff]
    %v41 = vld [vmem:[#allocation2 + $0x58] sm:$0xff]
    %v42 = vld [vmem:[#allocation2 + $0x60] sm:$0xff]
    %v43 = vld [vmem:[#allocation2 + $0x68] sm:$0xff]
    %v44 = vld [vmem:[#allocation2 + $0x70] sm:$0xff]
    %v45 = vld [vmem:[#allocation2 + $0x78] sm:$0xff]
    %v46 = vld [vmem:[%s1] sm:$0xff]
    %v47 = vld [vmem:[%s1 + $0x8] sm:$0xff]
    %v48 = vld [vmem:[%s2] sm:$0x1]
    %v50 = vperm.slane %v48, 0
    %vm52 = vcmask 130048
    %v54 = vsel %vm52, %v30, 0
    %v57 = vsel %vm52, %v31, 0
    %v60 = vsel %vm52, %v32, 0
    %v63 = vsel %vm52, %v33, 0
    %v66 = vsel %vm52, %v34, 0
    %v69 = vsel %vm52, %v35, 0
    %v72 = vsel %vm52, %v36, 0
    %v75 = vsel %vm52, %v37, 0
    %v78 = vsel %vm52, %v38, 0
    %v81 = vsel %vm52, %v39, 0
    %v84 = vsel %vm52, %v40, 0
    %v87 = vsel %vm52, %v41, 0
    %v90 = vsel %vm52, %v42, 0
    %v93 = vsel %vm52, %v43, 0
    %v96 = vsel %vm52, %v44, 0
    %v99 = vsel %vm52, %v45, 0
    %101 = vmatpush.msra.mxu0 0.0
    %102 = vmatpush.msra.mxu0 0.0
    %103 = vmatpush.msra.mxu0 0.0
    %104 = vmatpush.msra.mxu0 0.0
    %105 = vmatpush.msra.mxu0 0.0
    %106 = vmatpush.msra.mxu0 0.0
    %107 = vmatpush.msra.mxu0 0.0
    %108 = vmatpush.msra.mxu0 0.0
    %109 = vmatpush.msra.mxu0 0.0
    %110 = vmatpush.msra.mxu0 0.0
    %111 = vmatpush.msra.mxu0 0.0
    %112 = vmatpush.msra.mxu0 0.0
    %113 = vmatpush.msra.mxu0 0.0
    %114 = vmatpush.msra.mxu0 0.0
    %115 = vmatpush.msra.mxu0 %v47
    %116 = vmatpush.msra.mxu0 %v46
    %117 = vmatmul.f32.gmra.mxu0 %v54
    %v118 = vpop.f32.mrf.mxu0
    %v119 = vadd.f32 %v50, %v118
    %120 = vmatmul.f32.gmra.mxu0 %v57
    %v121 = vpop.f32.mrf.mxu0
    %v122 = vadd.f32 %v50, %v121
    %123 = vmatmul.f32.gmra.mxu0 %v60
    %v124 = vpop.f32.mrf.mxu0
    %v125 = vadd.f32 %v50, %v124
    %126 = vmatmul.f32.gmra.mxu0 %v63
    %v127 = vpop.f32.mrf.mxu0
    %v128 = vadd.f32 %v50, %v127
    %129 = vmatmul.f32.gmra.mxu0 %v66
    %v130 = vpop.f32.mrf.mxu0
    %v131 = vadd.f32 %v50, %v130
    %132 = vmatmul.f32.gmra.mxu0 %v69
    %v133 = vpop.f32.mrf.mxu0
    %v134 = vadd.f32 %v50, %v133
    %135 = vmatmul.f32.gmra.mxu0 %v72
    %v136 = vpop.f32.mrf.mxu0
    %v137 = vadd.f32 %v50, %v136
    %138 = vmatmul.f32.gmra.mxu0 %v75
    %v139 = vpop.f32.mrf.mxu0
    %v140 = vadd.f32 %v50, %v139
    %141 = vmatmul.f32.gmra.mxu0 %v78
    %v142 = vpop.f32.mrf.mxu0
    %v143 = vadd.f32 %v50, %v142
    %144 = vmatmul.f32.gmra.mxu0 %v81
    %v145 = vpop.f32.mrf.mxu0
    %v146 = vadd.f32 %v50, %v145
    %147 = vmatmul.f32.gmra.mxu0 %v84
    %v148 = vpop.f32.mrf.mxu0
    %v149 = vadd.f32 %v50, %v148
    %150 = vmatmul.f32.gmra.mxu0 %v87
    %v151 = vpop.f32.mrf.mxu0
    %v152 = vadd.f32 %v50, %v151
    %153 = vmatmul.f32.gmra.mxu0 %v90
    %v154 = vpop.f32.mrf.mxu0
    %v155 = vadd.f32 %v50, %v154
    %156 = vmatmul.f32.gmra.mxu0 %v93
    %v157 = vpop.f32.mrf.mxu0
    %v158 = vadd.f32 %v50, %v157
    %159 = vmatmul.f32.gmra.mxu0 %v96
    %v160 = vpop.f32.mrf.mxu0
    %v161 = vadd.f32 %v50, %v160
    %162 = vmatmul.f32.gmra.mxu0 %v99
    %v163 = vpop.f32.mrf.mxu0
    %v164 = vadd.f32 %v50, %v163
    %165 = vdwg.mxu0
    %v166 = vsub.f32 0.0, %v119
    %v167 = vsub.f32 0.0, %v122
    %v168 = vsub.f32 0.0, %v125
    %v169 = vsub.f32 0.0, %v128
    %v170 = vsub.f32 0.0, %v131
    %v171 = vsub.f32 0.0, %v134
    %v172 = vsub.f32 0.0, %v137
    %v173 = vsub.f32 0.0, %v140
    %v174 = vsub.f32 0.0, %v143
    %v175 = vsub.f32 0.0, %v146
    %v176 = vsub.f32 0.0, %v149
    %v177 = vsub.f32 0.0, %v152
    %v178 = vsub.f32 0.0, %v155
    %v179 = vsub.f32 0.0, %v158
    %v180 = vsub.f32 0.0, %v161
    %v181 = vsub.f32 0.0, %v164
    %v182 = vmul.f32 %v166, 1.442695
    %v183 = vpow.pop %v182
    %v184 = vmul.f32 %v167, 1.442695
    %v185 = vpow.pop %v184
    %v186 = vmul.f32 %v168, 1.442695
    %v187 = vpow.pop %v186
    %v188 = vmul.f32 %v169, 1.442695
    %v189 = vpow.pop %v188
    %v190 = vmul.f32 %v170, 1.442695
    %v191 = vpow.pop %v190
    %v192 = vmul.f32 %v171, 1.442695
    %v193 = vpow.pop %v192
    %v194 = vmul.f32 %v172, 1.442695
    %v195 = vpow.pop %v194
    %v196 = vmul.f32 %v173, 1.442695
    %v197 = vpow.pop %v196
    %v198 = vmul.f32 %v174, 1.442695
    %v199 = vpow.pop %v198
    %v200 = vmul.f32 %v175, 1.442695
    %v201 = vpow.pop %v200
    %v202 = vmul.f32 %v176, 1.442695
    %v203 = vpow.pop %v202
    %v204 = vmul.f32 %v177, 1.442695
    %v205 = vpow.pop %v204
    %v206 = vmul.f32 %v178, 1.442695
    %v207 = vpow.pop %v206
    %v208 = vmul.f32 %v179, 1.442695
    %v209 = vpow.pop %v208
    %v210 = vmul.f32 %v180, 1.442695
    %v211 = vpow.pop %v210
    %v212 = vmul.f32 %v181, 1.442695
    %v213 = vpow.pop %v212
    %v214 = vadd.f32 %v183, 1.0
    %v215 = vadd.f32 %v185, 1.0
    %v216 = vadd.f32 %v187, 1.0
    %v217 = vadd.f32 %v189, 1.0
    %v218 = vadd.f32 %v191, 1.0
    %v219 = vadd.f32 %v193, 1.0
    %v220 = vadd.f32 %v195, 1.0
    %v221 = vadd.f32 %v197, 1.0
    %v222 = vadd.f32 %v199, 1.0
    %v223 = vadd.f32 %v201, 1.0
    %v224 = vadd.f32 %v203, 1.0
    %v225 = vadd.f32 %v205, 1.0
    %v226 = vadd.f32 %v207, 1.0
    %v227 = vadd.f32 %v209, 1.0
    %v228 = vadd.f32 %v211, 1.0
    %v229 = vadd.f32 %v213, 1.0
    %v230 = vrcp.pop %v214
    %v231 = vmul.f32 %v214, %v230
    %v232 = vsub.f32 1.0, %v231
    %v233 = vmul.f32 %v230, %v232
    %v234 = vadd.f32 %v230, %v233
    %vm235 = vweird.f32 %v214
    %vm236 = vweird.f32 %v230
    %vm237 = vmor %vm235, %vm236
    %v238 = vsel %vm237, %v230, %v234
    %v239 = vand.u32 2147483647, %v214
    %vm240 = vcmp.eq.f32.partialorder %v239, 8.507059e+37
    %v241 = vand.u32 %v214, 2147483648
    %v242 = vor.u32 1.1754944e-38, %v241
    %v243 = vsel %vm240, %v242, %v238
    %v244 = vmul.f32 1.0, %v243
    %v245 = vrcp.pop %v215
    %v246 = vmul.f32 %v215, %v245
    %v247 = vsub.f32 1.0, %v246
    %v248 = vmul.f32 %v245, %v247
    %v249 = vadd.f32 %v245, %v248
    %vm250 = vweird.f32 %v215
    %vm251 = vweird.f32 %v245
    %vm252 = vmor %vm250, %vm251
    %v253 = vsel %vm252, %v245, %v249
    %v254 = vand.u32 2147483647, %v215
    %vm255 = vcmp.eq.f32.partialorder %v254, 8.507059e+37
    %v256 = vand.u32 %v215, 2147483648
    %v257 = vor.u32 1.1754944e-38, %v256
    %v258 = vsel %vm255, %v257, %v253
    %v259 = vmul.f32 1.0, %v258
    %v260 = vrcp.pop %v216
    %v261 = vmul.f32 %v216, %v260
    %v262 = vsub.f32 1.0, %v261
    %v263 = vmul.f32 %v260, %v262
    %v264 = vadd.f32 %v260, %v263
    %vm265 = vweird.f32 %v216
    %vm266 = vweird.f32 %v260
    %vm267 = vmor %vm265, %vm266
    %v268 = vsel %vm267, %v260, %v264
    %v269 = vand.u32 2147483647, %v216
    %vm270 = vcmp.eq.f32.partialorder %v269, 8.507059e+37
    %v271 = vand.u32 %v216, 2147483648
    %v272 = vor.u32 1.1754944e-38, %v271
    %v273 = vsel %vm270, %v272, %v268
    %v274 = vmul.f32 1.0, %v273
    %v275 = vrcp.pop %v217
    %v276 = vmul.f32 %v217, %v275
    %v277 = vsub.f32 1.0, %v276
    %v278 = vmul.f32 %v275, %v277
    %v279 = vadd.f32 %v275, %v278
    %vm280 = vweird.f32 %v217
    %vm281 = vweird.f32 %v275
    %vm282 = vmor %vm280, %vm281
    %v283 = vsel %vm282, %v275, %v279
    %v284 = vand.u32 2147483647, %v217
    %vm285 = vcmp.eq.f32.partialorder %v284, 8.507059e+37
    %v286 = vand.u32 %v217, 2147483648
    %v287 = vor.u32 1.1754944e-38, %v286
    %v288 = vsel %vm285, %v287, %v283
    %v289 = vmul.f32 1.0, %v288
    %v290 = vrcp.pop %v218
    %v291 = vmul.f32 %v218, %v290
    %v292 = vsub.f32 1.0, %v291
    %v293 = vmul.f32 %v290, %v292
    %v294 = vadd.f32 %v290, %v293
    %vm295 = vweird.f32 %v218
    %vm296 = vweird.f32 %v290
    %vm297 = vmor %vm295, %vm296
    %v298 = vsel %vm297, %v290, %v294
    %v299 = vand.u32 2147483647, %v218
    %vm300 = vcmp.eq.f32.partialorder %v299, 8.507059e+37
    %v301 = vand.u32 %v218, 2147483648
    %v302 = vor.u32 1.1754944e-38, %v301
    %v303 = vsel %vm300, %v302, %v298
    %v304 = vmul.f32 1.0, %v303
    %v305 = vrcp.pop %v219
    %v306 = vmul.f32 %v219, %v305
    %v307 = vsub.f32 1.0, %v306
    %v308 = vmul.f32 %v305, %v307
    %v309 = vadd.f32 %v305, %v308
    %vm310 = vweird.f32 %v219
    %vm311 = vweird.f32 %v305
    %vm312 = vmor %vm310, %vm311
    %v313 = vsel %vm312, %v305, %v309
    %v314 = vand.u32 2147483647, %v219
    %vm315 = vcmp.eq.f32.partialorder %v314, 8.507059e+37
    %v316 = vand.u32 %v219, 2147483648
    %v317 = vor.u32 1.1754944e-38, %v316
    %v318 = vsel %vm315, %v317, %v313
    %v319 = vmul.f32 1.0, %v318
    %v320 = vrcp.pop %v220
    %v321 = vmul.f32 %v220, %v320
    %v322 = vsub.f32 1.0, %v321
    %v323 = vmul.f32 %v320, %v322
    %v324 = vadd.f32 %v320, %v323
    %vm325 = vweird.f32 %v220
    %vm326 = vweird.f32 %v320
    %vm327 = vmor %vm325, %vm326
    %v328 = vsel %vm327, %v320, %v324
    %v329 = vand.u32 2147483647, %v220
    %vm330 = vcmp.eq.f32.partialorder %v329, 8.507059e+37
    %v331 = vand.u32 %v220, 2147483648
    %v332 = vor.u32 1.1754944e-38, %v331
    %v333 = vsel %vm330, %v332, %v328
    %v334 = vmul.f32 1.0, %v333
    %v335 = vrcp.pop %v221
    %v336 = vmul.f32 %v221, %v335
    %v337 = vsub.f32 1.0, %v336
    %v338 = vmul.f32 %v335, %v337
    %v339 = vadd.f32 %v335, %v338
    %vm340 = vweird.f32 %v221
    %vm341 = vweird.f32 %v335
    %vm342 = vmor %vm340, %vm341
    %v343 = vsel %vm342, %v335, %v339
    %v344 = vand.u32 2147483647, %v221
    %vm345 = vcmp.eq.f32.partialorder %v344, 8.507059e+37
    %v346 = vand.u32 %v221, 2147483648
    %v347 = vor.u32 1.1754944e-38, %v346
    %v348 = vsel %vm345, %v347, %v343
    %v349 = vmul.f32 1.0, %v348
    %v350 = vrcp.pop %v222
    %v351 = vmul.f32 %v222, %v350
    %v352 = vsub.f32 1.0, %v351
    %v353 = vmul.f32 %v350, %v352
    %v354 = vadd.f32 %v350, %v353
    %vm355 = vweird.f32 %v222
    %vm356 = vweird.f32 %v350
    %vm357 = vmor %vm355, %vm356
    %v358 = vsel %vm357, %v350, %v354
    %v359 = vand.u32 2147483647, %v222
    %vm360 = vcmp.eq.f32.partialorder %v359, 8.507059e+37
    %v361 = vand.u32 %v222, 2147483648
    %v362 = vor.u32 1.1754944e-38, %v361
    %v363 = vsel %vm360, %v362, %v358
    %v364 = vmul.f32 1.0, %v363
    %v365 = vrcp.pop %v223
    %v366 = vmul.f32 %v223, %v365
    %v367 = vsub.f32 1.0, %v366
    %v368 = vmul.f32 %v365, %v367
    %v369 = vadd.f32 %v365, %v368
    %vm370 = vweird.f32 %v223
    %vm371 = vweird.f32 %v365
    %vm372 = vmor %vm370, %vm371
    %v373 = vsel %vm372, %v365, %v369
    %v374 = vand.u32 2147483647, %v223
    %vm375 = vcmp.eq.f32.partialorder %v374, 8.507059e+37
    %v376 = vand.u32 %v223, 2147483648
    %v377 = vor.u32 1.1754944e-38, %v376
    %v378 = vsel %vm375, %v377, %v373
    %v379 = vmul.f32 1.0, %v378
    %v380 = vrcp.pop %v224
    %v381 = vmul.f32 %v224, %v380
    %v382 = vsub.f32 1.0, %v381
    %v383 = vmul.f32 %v380, %v382
    %v384 = vadd.f32 %v380, %v383
    %vm385 = vweird.f32 %v224
    %vm386 = vweird.f32 %v380
    %vm387 = vmor %vm385, %vm386
    %v388 = vsel %vm387, %v380, %v384
    %v389 = vand.u32 2147483647, %v224
    %vm390 = vcmp.eq.f32.partialorder %v389, 8.507059e+37
    %v391 = vand.u32 %v224, 2147483648
    %v392 = vor.u32 1.1754944e-38, %v391
    %v393 = vsel %vm390, %v392, %v388
    %v394 = vmul.f32 1.0, %v393
    %v395 = vrcp.pop %v225
    %v396 = vmul.f32 %v225, %v395
    %v397 = vsub.f32 1.0, %v396
    %v398 = vmul.f32 %v395, %v397
    %v399 = vadd.f32 %v395, %v398
    %vm400 = vweird.f32 %v225
    %vm401 = vweird.f32 %v395
    %vm402 = vmor %vm400, %vm401
    %v403 = vsel %vm402, %v395, %v399
    %v404 = vand.u32 2147483647, %v225
    %vm405 = vcmp.eq.f32.partialorder %v404, 8.507059e+37
    %v406 = vand.u32 %v225, 2147483648
    %v407 = vor.u32 1.1754944e-38, %v406
    %v408 = vsel %vm405, %v407, %v403
    %v409 = vmul.f32 1.0, %v408
    %v410 = vrcp.pop %v226
    %v411 = vmul.f32 %v226, %v410
    %v412 = vsub.f32 1.0, %v411
    %v413 = vmul.f32 %v410, %v412
    %v414 = vadd.f32 %v410, %v413
    %vm415 = vweird.f32 %v226
    %vm416 = vweird.f32 %v410
    %vm417 = vmor %vm415, %vm416
    %v418 = vsel %vm417, %v410, %v414
    %v419 = vand.u32 2147483647, %v226
    %vm420 = vcmp.eq.f32.partialorder %v419, 8.507059e+37
    %v421 = vand.u32 %v226, 2147483648
    %v422 = vor.u32 1.1754944e-38, %v421
    %v423 = vsel %vm420, %v422, %v418
    %v424 = vmul.f32 1.0, %v423
    %v425 = vrcp.pop %v227
    %v426 = vmul.f32 %v227, %v425
    %v427 = vsub.f32 1.0, %v426
    %v428 = vmul.f32 %v425, %v427
    %v429 = vadd.f32 %v425, %v428
    %vm430 = vweird.f32 %v227
    %vm431 = vweird.f32 %v425
    %vm432 = vmor %vm430, %vm431
    %v433 = vsel %vm432, %v425, %v429
    %v434 = vand.u32 2147483647, %v227
    %vm435 = vcmp.eq.f32.partialorder %v434, 8.507059e+37
    %v436 = vand.u32 %v227, 2147483648
    %v437 = vor.u32 1.1754944e-38, %v436
    %v438 = vsel %vm435, %v437, %v433
    %v439 = vmul.f32 1.0, %v438
    %v440 = vrcp.pop %v228
    %v441 = vmul.f32 %v228, %v440
    %v442 = vsub.f32 1.0, %v441
    %v443 = vmul.f32 %v440, %v442
    %v444 = vadd.f32 %v440, %v443
    %vm445 = vweird.f32 %v228
    %vm446 = vweird.f32 %v440
    %vm447 = vmor %vm445, %vm446
    %v448 = vsel %vm447, %v440, %v444
    %v449 = vand.u32 2147483647, %v228
    %vm450 = vcmp.eq.f32.partialorder %v449, 8.507059e+37
    %v451 = vand.u32 %v228, 2147483648
    %v452 = vor.u32 1.1754944e-38, %v451
    %v453 = vsel %vm450, %v452, %v448
    %v454 = vmul.f32 1.0, %v453
    %v455 = vrcp.pop %v229
    %v456 = vmul.f32 %v229, %v455
    %v457 = vsub.f32 1.0, %v456
    %v458 = vmul.f32 %v455, %v457
    %v459 = vadd.f32 %v455, %v458
    %vm460 = vweird.f32 %v229
    %vm461 = vweird.f32 %v455
    %vm462 = vmor %vm460, %vm461
    %v463 = vsel %vm462, %v455, %v459
    %v464 = vand.u32 2147483647, %v229
    %vm465 = vcmp.eq.f32.partialorder %v464, 8.507059e+37
    %v466 = vand.u32 %v229, 2147483648
    %v467 = vor.u32 1.1754944e-38, %v466
    %v468 = vsel %vm465, %v467, %v463
    %v469 = vmul.f32 1.0, %v468
    %v470 = vmul.f32 %v119, %v244
    %v471 = vmul.f32 %v122, %v259
    %v472 = vmul.f32 %v125, %v274
    %v473 = vmul.f32 %v128, %v289
    %v474 = vmul.f32 %v131, %v304
    %v475 = vmul.f32 %v134, %v319
    %v476 = vmul.f32 %v137, %v334
    %v477 = vmul.f32 %v140, %v349
    %v478 = vmul.f32 %v143, %v364
    %v479 = vmul.f32 %v146, %v379
    %v480 = vmul.f32 %v149, %v394
    %v481 = vmul.f32 %v152, %v409
    %v482 = vmul.f32 %v155, %v424
    %v483 = vmul.f32 %v158, %v439
    %v484 = vmul.f32 %v161, %v454
    %v485 = vmul.f32 %v164, %v469
    %486 = vst.msk [vmem:[%s3] sm:$0xff] %vm52, %v470
    %487 = vst.msk [vmem:[%s3 + $0x8] sm:$0xff] %vm52, %v471
    %488 = vst.msk [vmem:[%s3 + $0x10] sm:$0xff] %vm52, %v472
    %489 = vst.msk [vmem:[%s3 + $0x18] sm:$0xff] %vm52, %v473
    %490 = vst.msk [vmem:[%s3 + $0x20] sm:$0xff] %vm52, %v474
    %491 = vst.msk [vmem:[%s3 + $0x28] sm:$0xff] %vm52, %v475
    %492 = vst.msk [vmem:[%s3 + $0x30] sm:$0xff] %vm52, %v476
    %493 = vst.msk [vmem:[%s3 + $0x38] sm:$0xff] %vm52, %v477
    %494 = vst.msk [vmem:[%s3 + $0x40] sm:$0xff] %vm52, %v478
    %495 = vst.msk [vmem:[%s3 + $0x48] sm:$0xff] %vm52, %v479
    %496 = vst.msk [vmem:[%s3 + $0x50] sm:$0xff] %vm52, %v480
    %497 = vst.msk [vmem:[%s3 + $0x58] sm:$0xff] %vm52, %v481
    %498 = vst.msk [vmem:[%s3 + $0x60] sm:$0xff] %vm52, %v482
    %499 = vst.msk [vmem:[%s3 + $0x68] sm:$0xff] %vm52, %v483
    %500 = vst.msk [vmem:[%s3 + $0x70] sm:$0xff] %vm52, %v484
    %501 = vst.msk [vmem:[%s3 + $0x78] sm:$0xff] %vm52, %v485
    // Predicated region
    $region18: #{cot3_forward.3} parent=1 // pred_check
      _
    $region19: #{cot3_forward.3} parent=1 // pred_check_branch
      %503 = sbr.rel (0) target = $region21
    $region20: #{cot3_forward.3} parent=1 // pred_region
      _
    $region21: #{cot3_forward.3} parent=1 // pred_fallthru
      _
    // Predicated region
    $region22: #{cot3_forward.3} parent=1 // pred_check
      _
    $region23: #{cot3_forward.3} parent=1 // pred_check_branch
      %505 = sbr.rel (0) target = $region25
    $region24: #{cot3_forward.3} parent=1 // pred_region
      _
    $region25: #{cot3_forward.3} parent=1 // pred_fallthru
      _
    %506 = vsyncpa [#allocation3], 1

// kernel: cot3_forward.5
$region0: #{cot3_forward.5}
  #allocation0 [shape = 'u32[]', space=smem, size = 0x4, offset = 0x4, fixed_abs, tag = 'smem constant byte address 0x4 - core index']
  #allocation1 [shape = 'u32[72,128]{1,0:T(1,128)}', space=vmem, size = 0x9000, scoped, tag = 'internal scratch']
  %s0 = inlined_call_operand.vmem [shape: f32[128,8], index: 0, kind: input, shape index: {}]
  %s1 = inlined_call_operand.vmem [shape: f32[128,16], index: 1, kind: input, shape index: {}]
  %s2 = inlined_call_operand.vmem [shape: f32[8,16], index: 2, kind: input, shape index: {}]
  %s3 = inlined_call_operand.vmem [shape: f32[16,16], index: 3, kind: input, shape index: {}]
  %s4 = inlined_call_operand.vmem [shape: f32[1,16], index: 4, kind: input, shape index: {}]
  %s5 = inlined_call_operand.hbm [shape: f32[128,16], index: 5, kind: output, shape index: {}]
  %s6 = sld [smem:[#allocation0]]
  $region30: #{cot3_forward.5} parent=0
    _
  %s8 = ssub.s32 1, %s6
  %s9 = scalar_select 0, %s8, %s6
  $region1: #{cot3_forward.5} parent=0
    #allocation2 [shape = 'u8[65536]{0}', space=vmem, size = 0x10000, scoped, tag = 'output window, operand 0, single buffered']
    #allocation3 [shape = 's32[1]{0}', space=sflag, size = 0x4, scoped, tag = 'scoped memory for cot3_forward.5']
    %10 = vsyncpa [#allocation3], 0
    // Predicated region
    $region2: #{cot3_forward.5} parent=1 // pred_check
      _
    $region3: #{cot3_forward.5} parent=1 // pred_check_branch
      %12 = sbr.rel (0) target = $region5
    $region4: #{cot3_forward.5} parent=1 // pred_region
      _
    $region5: #{cot3_forward.5} parent=1 // pred_fallthru
      _
    // Predicated region
    $region6: #{cot3_forward.5} parent=1 // pred_check
      _
    $region7: #{cot3_forward.5} parent=1 // pred_check_branch
      %14 = sbr.rel (0) target = $region9
    $region8: #{cot3_forward.5} parent=1 // pred_region
      _
    $region9: #{cot3_forward.5} parent=1 // pred_fallthru
      _
    // Predicated region
    $region10: #{cot3_forward.5} parent=1 // pred_check
      _
    $region11: #{cot3_forward.5} parent=1 // pred_check_branch
      %16 = sbr.rel (0) target = $region13
    $region12: #{cot3_forward.5} parent=1 // pred_region
      _
    $region13: #{cot3_forward.5} parent=1 // pred_fallthru
      _
    // Predicated region
    $region14: #{cot3_forward.5} parent=1 // pred_check
      _
    $region15: #{cot3_forward.5} parent=1 // pred_check_branch
      %18 = sbr.rel (0) target = $region17
    $region16: #{cot3_forward.5} parent=1 // pred_region
      _
    $region17: #{cot3_forward.5} parent=1 // pred_fallthru
      _
    // Predicated region
    $region18: #{cot3_forward.5} parent=1 // pred_check
      _
    $region19: #{cot3_forward.5} parent=1 // pred_check_branch
      %20 = sbr.rel (0) target = $region21
    $region20: #{cot3_forward.5} parent=1 // pred_region
      _
    $region21: #{cot3_forward.5} parent=1 // pred_fallthru
      _
    %v21 = vld [vmem:[%s0] sm:$0xff]
    %v22 = vld [vmem:[%s0 + $0x8] sm:$0xff]
    %v23 = vld [vmem:[%s0 + $0x10] sm:$0xff]
    %v24 = vld [vmem:[%s0 + $0x18] sm:$0xff]
    %v25 = vld [vmem:[%s0 + $0x20] sm:$0xff]
    %v26 = vld [vmem:[%s0 + $0x28] sm:$0xff]
    %v27 = vld [vmem:[%s0 + $0x30] sm:$0xff]
    %v28 = vld [vmem:[%s0 + $0x38] sm:$0xff]
    %v29 = vld [vmem:[%s0 + $0x40] sm:$0xff]
    %v30 = vld [vmem:[%s0 + $0x48] sm:$0xff]
    %v31 = vld [vmem:[%s0 + $0x50] sm:$0xff]
    %v32 = vld [vmem:[%s0 + $0x58] sm:$0xff]
    %v33 = vld [vmem:[%s0 + $0x60] sm:$0xff]
    %v34 = vld [vmem:[%s0 + $0x68] sm:$0xff]
    %v35 = vld [vmem:[%s0 + $0x70] sm:$0xff]
    %v36 = vld [vmem:[%s0 + $0x78] sm:$0xff]
    %v37 = vld [vmem:[%s2] sm:$0xff]
    %v38 = vld [vmem:[%s1] sm:$0xff]
    %v39 = vld [vmem:[%s1 + $0x8] sm:$0xff]
    %v40 = vld [vmem:[%s1 + $0x10] sm:$0xff]
    %v41 = vld [vmem:[%s1 + $0x18] sm:$0xff]
    %v42 = vld [vmem:[%s1 + $0x20] sm:$0xff]
    %v43 = vld [vmem:[%s1 + $0x28] sm:$0xff]
    %v44 = vld [vmem:[%s1 + $0x30] sm:$0xff]
    %v45 = vld [vmem:[%s1 + $0x38] sm:$0xff]
    %v46 = vld [vmem:[%s1 + $0x40] sm:$0xff]
    %v47 = vld [vmem:[%s1 + $0x48] sm:$0xff]
    %v48 = vld [vmem:[%s1 + $0x50] sm:$0xff]
    %v49 = vld [vmem:[%s1 + $0x58] sm:$0xff]
    %v50 = vld [vmem:[%s1 + $0x60] sm:$0xff]
    %v51 = vld [vmem:[%s1 + $0x68] sm:$0xff]
    %v52 = vld [vmem:[%s1 + $0x70] sm:$0xff]
    %v53 = vld [vmem:[%s1 + $0x78] sm:$0xff]
    %v54 = vld [vmem:[%s3] sm:$0xff]
    %v55 = vld [vmem:[%s3 + $0x8] sm:$0xff]
    %vm56 = vcmask 130048
    %v58 = vsel %vm56, %v38, 0
    %v61 = vsel %vm56, %v39, 0
    %v64 = vsel %vm56, %v40, 0
    %v67 = vsel %vm56, %v41, 0
    %v70 = vsel %vm56, %v42, 0
    %v73 = vsel %vm56, %v43, 0
    %v76 = vsel %vm56, %v44, 0
    %v79 = vsel %vm56, %v45, 0
    %v82 = vsel %vm56, %v46, 0
    %v85 = vsel %vm56, %v47, 0
    %v88 = vsel %vm56, %v48, 0
    %v91 = vsel %vm56, %v49, 0
    %v94 = vsel %vm56, %v50, 0
    %v97 = vsel %vm56, %v51, 0
    %v100 = vsel %vm56, %v52, 0
    %v103 = vsel %vm56, %v53, 0
    %105 = vmatpush.msra.mxu0 0.0
    %106 = vmatpush.msra.mxu0 0.0
    %107 = vmatpush.msra.mxu0 0.0
    %108 = vmatpush.msra.mxu0 0.0
    %109 = vmatpush.msra.mxu0 0.0
    %110 = vmatpush.msra.mxu0 0.0
    %111 = vmatpush.msra.mxu0 0.0
    %112 = vmatpush.msra.mxu0 0.0
    %113 = vmatpush.msra.mxu0 0.0
    %114 = vmatpush.msra.mxu0 0.0
    %115 = vmatpush.msra.mxu0 0.0
    %116 = vmatpush.msra.mxu0 0.0
    %117 = vmatpush.msra.mxu0 0.0
    %118 = vmatpush.msra.mxu0 0.0
    %119 = vmatpush.msra.mxu0 %v55
    %120 = vmatpush.msra.mxu0 %v54
    %121 = vmatmul.f32.gmra.mxu0 %v58
    %v122 = vpop.f32.mrf.mxu0
    %v123 = vadd.f32 0.0, %v122
    %124 = vmatmul.f32.gmra.mxu0 %v61
    %v125 = vpop.f32.mrf.mxu0
    %v126 = vadd.f32 0.0, %v125
    %127 = vmatmul.f32.gmra.mxu0 %v64
    %v128 = vpop.f32.mrf.mxu0
    %v129 = vadd.f32 0.0, %v128
    %130 = vmatmul.f32.gmra.mxu0 %v67
    %v131 = vpop.f32.mrf.mxu0
    %v132 = vadd.f32 0.0, %v131
    %133 = vmatmul.f32.gmra.mxu0 %v70
    %v134 = vpop.f32.mrf.mxu0
    %v135 = vadd.f32 0.0, %v134
    %136 = vmatmul.f32.gmra.mxu0 %v73
    %v137 = vpop.f32.mrf.mxu0
    %v138 = vadd.f32 0.0, %v137
    %139 = vmatmul.f32.gmra.mxu0 %v76
    %v140 = vpop.f32.mrf.mxu0
    %v141 = vadd.f32 0.0, %v140
    %142 = vmatmul.f32.gmra.mxu0 %v79
    %v143 = vpop.f32.mrf.mxu0
    %v144 = vadd.f32 0.0, %v143
    %145 = vmatmul.f32.gmra.mxu0 %v82
    %v146 = vpop.f32.mrf.mxu0
    %v147 = vadd.f32 0.0, %v146
    %148 = vmatmul.f32.gmra.mxu0 %v85
    %v149 = vpop.f32.mrf.mxu0
    %v150 = vadd.f32 0.0, %v149
    %151 = vmatmul.f32.gmra.mxu0 %v88
    %v152 = vpop.f32.mrf.mxu0
    %v153 = vadd.f32 0.0, %v152
    %154 = vmatmul.f32.gmra.mxu0 %v91
    %v155 = vpop.f32.mrf.mxu0
    %v156 = vadd.f32 0.0, %v155
    %157 = vmatmul.f32.gmra.mxu0 %v94
    %v158 = vpop.f32.mrf.mxu0
    %v159 = vadd.f32 0.0, %v158
    %160 = vmatmul.f32.gmra.mxu0 %v97
    %v161 = vpop.f32.mrf.mxu0
    %v162 = vadd.f32 0.0, %v161
    %163 = vmatmul.f32.gmra.mxu0 %v100
    %v164 = vpop.f32.mrf.mxu0
    %v165 = vadd.f32 0.0, %v164
    %166 = vmatmul.f32.gmra.mxu0 %v103
    %v167 = vpop.f32.mrf.mxu0
    %v168 = vadd.f32 0.0, %v167
    %169 = vdwg.mxu0
    %vm170 = vcmask 64512
    %v172 = vsel %vm170, %v21, 0
    %v175 = vsel %vm170, %v22, 0
    %v178 = vsel %vm170, %v23, 0
    %v181 = vsel %vm170, %v24, 0
    %v184 = vsel %vm170, %v25, 0
    %v187 = vsel %vm170, %v26, 0
    %v190 = vsel %vm170, %v27, 0
    %v193 = vsel %vm170, %v28, 0
    %v196 = vsel %vm170, %v29, 0
    %v199 = vsel %vm170, %v30, 0
    %v202 = vsel %vm170, %v31, 0
    %v205 = vsel %vm170, %v32, 0
    %v208 = vsel %vm170, %v33, 0
    %v211 = vsel %vm170, %v34, 0
    %v214 = vsel %vm170, %v35, 0
    %v217 = vsel %vm170, %v36, 0
    %219 = vmatpush.msra.mxu0 0.0
    %220 = vmatpush.msra.mxu0 0.0
    %221 = vmatpush.msra.mxu0 0.0
    %222 = vmatpush.msra.mxu0 0.0
    %223 = vmatpush.msra.mxu0 0.0
    %224 = vmatpush.msra.mxu0 0.0
    %225 = vmatpush.msra.mxu0 0.0
    %226 = vmatpush.msra.mxu0 0.0
    %227 = vmatpush.msra.mxu0 0.0
    %228 = vmatpush.msra.mxu0 0.0
    %229 = vmatpush.msra.mxu0 0.0
    %230 = vmatpush.msra.mxu0 0.0
    %231 = vmatpush.msra.mxu0 0.0
    %232 = vmatpush.msra.mxu0 0.0
    %233 = vmatpush.msra.mxu0 0.0
    %234 = vmatpush.msra.mxu0 %v37
    %235 = vmatmul.f32.gmra.mxu0 %v172
    %v236 = vpop.f32.mrf.mxu0
    %v237 = vadd.f32 %v123, %v236
    %238 = vmatmul.f32.gmra.mxu0 %v175
    %v239 = vpop.f32.mrf.mxu0
    %v240 = vadd.f32 %v126, %v239
    %241 = vmatmul.f32.gmra.mxu0 %v178
    %v242 = vpop.f32.mrf.mxu0
    %v243 = vadd.f32 %v129, %v242
    %244 = vmatmul.f32.gmra.mxu0 %v181
    %v245 = vpop.f32.mrf.mxu0
    %v246 = vadd.f32 %v132, %v245
    %247 = vmatmul.f32.gmra.mxu0 %v184
    %v248 = vpop.f32.mrf.mxu0
    %v249 = vadd.f32 %v135, %v248
    %250 = vmatmul.f32.gmra.mxu0 %v187
    %v251 = vpop.f32.mrf.mxu0
    %v252 = vadd.f32 %v138, %v251
    %253 = vmatmul.f32.gmra.mxu0 %v190
    %v254 = vpop.f32.mrf.mxu0
    %v255 = vadd.f32 %v141, %v254
    %256 = vmatmul.f32.gmra.mxu0 %v193
    %v257 = vpop.f32.mrf.mxu0
    %v258 = vadd.f32 %v144, %v257
    %259 = vmatmul.f32.gmra.mxu0 %v196
    %v260 = vpop.f32.mrf.mxu0
    %v261 = vadd.f32 %v147, %v260
    %262 = vmatmul.f32.gmra.mxu0 %v199
    %v263 = vpop.f32.mrf.mxu0
    %v264 = vadd.f32 %v150, %v263
    %265 = vmatmul.f32.gmra.mxu0 %v202
    %v266 = vpop.f32.mrf.mxu0
    %v267 = vadd.f32 %v153, %v266
    %268 = vmatmul.f32.gmra.mxu0 %v205
    %v269 = vpop.f32.mrf.mxu0
    %v270 = vadd.f32 %v156, %v269
    %271 = vmatmul.f32.gmra.mxu0 %v208
    %v272 = vpop.f32.mrf.mxu0
    %v273 = vadd.f32 %v159, %v272
    %274 = vmatmul.f32.gmra.mxu0 %v211
    %v275 = vpop.f32.mrf.mxu0
    %v276 = vadd.f32 %v162, %v275
    %277 = vmatmul.f32.gmra.mxu0 %v214
    %v278 = vpop.f32.mrf.mxu0
    %v279 = vadd.f32 %v165, %v278
    %280 = vmatmul.f32.gmra.mxu0 %v217
    %v281 = vpop.f32.mrf.mxu0
    %v282 = vadd.f32 %v168, %v281
    %283 = vdwg.mxu0
    %v284 = vld [vmem:[%s4] sm:$0x1]
    %v286 = vperm.slane %v284, 0
    %v288 = vadd.f32 %v237, %v286
    %v289 = vadd.f32 %v240, %v286
    %v290 = vadd.f32 %v243, %v286
    %v291 = vadd.f32 %v246, %v286
    %v292 = vadd.f32 %v249, %v286
    %v293 = vadd.f32 %v252, %v286
    %v294 = vadd.f32 %v255, %v286
    %v295 = vadd.f32 %v258, %v286
    %v296 = vadd.f32 %v261, %v286
    %v297 = vadd.f32 %v264, %v286
    %v298 = vadd.f32 %v267, %v286
    %v299 = vadd.f32 %v270, %v286
    %v300 = vadd.f32 %v273, %v286
    %v301 = vadd.f32 %v276, %v286
    %v302 = vadd.f32 %v279, %v286
    %v303 = vadd.f32 %v282, %v286
    %v304 = vsub.f32 0.0, %v288
    %v305 = vsub.f32 0.0, %v289
    %v306 = vsub.f32 0.0, %v290
    %v307 = vsub.f32 0.0, %v291
    %v308 = vsub.f32 0.0, %v292
    %v309 = vsub.f32 0.0, %v293
    %v310 = vsub.f32 0.0, %v294
    %v311 = vsub.f32 0.0, %v295
    %v312 = vsub.f32 0.0, %v296
    %v313 = vsub.f32 0.0, %v297
    %v314 = vsub.f32 0.0, %v298
    %v315 = vsub.f32 0.0, %v299
    %v316 = vsub.f32 0.0, %v300
    %v317 = vsub.f32 0.0, %v301
    %v318 = vsub.f32 0.0, %v302
    %v319 = vsub.f32 0.0, %v303
    %v320 = vmul.f32 %v304, 1.442695
    %v321 = vpow.pop %v320
    %v322 = vmul.f32 %v305, 1.442695
    %v323 = vpow.pop %v322
    %v324 = vmul.f32 %v306, 1.442695
    %v325 = vpow.pop %v324
    %v326 = vmul.f32 %v307, 1.442695
    %v327 = vpow.pop %v326
    %v328 = vmul.f32 %v308, 1.442695
    %v329 = vpow.pop %v328
    %v330 = vmul.f32 %v309, 1.442695
    %v331 = vpow.pop %v330
    %v332 = vmul.f32 %v310, 1.442695
    %v333 = vpow.pop %v332
    %v334 = vmul.f32 %v311, 1.442695
    %v335 = vpow.pop %v334
    %v336 = vmul.f32 %v312, 1.442695
    %v337 = vpow.pop %v336
    %v338 = vmul.f32 %v313, 1.442695
    %v339 = vpow.pop %v338
    %v340 = vmul.f32 %v314, 1.442695
    %v341 = vpow.pop %v340
    %v342 = vmul.f32 %v315, 1.442695
    %v343 = vpow.pop %v342
    %v344 = vmul.f32 %v316, 1.442695
    %v345 = vpow.pop %v344
    %v346 = vmul.f32 %v317, 1.442695
    %v347 = vpow.pop %v346
    %v348 = vmul.f32 %v318, 1.442695
    %v349 = vpow.pop %v348
    %v350 = vmul.f32 %v319, 1.442695
    %v351 = vpow.pop %v350
    %v352 = vadd.f32 %v321, 1.0
    %v353 = vadd.f32 %v323, 1.0
    %v354 = vadd.f32 %v325, 1.0
    %v355 = vadd.f32 %v327, 1.0
    %v356 = vadd.f32 %v329, 1.0
    %v357 = vadd.f32 %v331, 1.0
    %v358 = vadd.f32 %v333, 1.0
    %v359 = vadd.f32 %v335, 1.0
    %v360 = vadd.f32 %v337, 1.0
    %v361 = vadd.f32 %v339, 1.0
    %v362 = vadd.f32 %v341, 1.0
    %v363 = vadd.f32 %v343, 1.0
    %v364 = vadd.f32 %v345, 1.0
    %v365 = vadd.f32 %v347, 1.0
    %v366 = vadd.f32 %v349, 1.0
    %v367 = vadd.f32 %v351, 1.0
    %v368 = vrcp.pop %v352
    %v369 = vmul.f32 %v352, %v368
    %v370 = vsub.f32 1.0, %v369
    %v371 = vmul.f32 %v368, %v370
    %v372 = vadd.f32 %v368, %v371
    %vm373 = vweird.f32 %v352
    %vm374 = vweird.f32 %v368
    %vm375 = vmor %vm373, %vm374
    %v376 = vsel %vm375, %v368, %v372
    %v377 = vand.u32 2147483647, %v352
    %vm378 = vcmp.eq.f32.partialorder %v377, 8.507059e+37
    %v379 = vand.u32 %v352, 2147483648
    %v380 = vor.u32 1.1754944e-38, %v379
    %v381 = vsel %vm378, %v380, %v376
    %v382 = vmul.f32 1.0, %v381
    %v383 = vrcp.pop %v353
    %v384 = vmul.f32 %v353, %v383
    %v385 = vsub.f32 1.0, %v384
    %v386 = vmul.f32 %v383, %v385
    %v387 = vadd.f32 %v383, %v386
    %vm388 = vweird.f32 %v353
    %vm389 = vweird.f32 %v383
    %vm390 = vmor %vm388, %vm389
    %v391 = vsel %vm390, %v383, %v387
    %v392 = vand.u32 2147483647, %v353
    %vm393 = vcmp.eq.f32.partialorder %v392, 8.507059e+37
    %v394 = vand.u32 %v353, 2147483648
    %v395 = vor.u32 1.1754944e-38, %v394
    %v396 = vsel %vm393, %v395, %v391
    %v397 = vmul.f32 1.0, %v396
    %v398 = vrcp.pop %v354
    %v399 = vmul.f32 %v354, %v398
    %v400 = vsub.f32 1.0, %v399
    %v401 = vmul.f32 %v398, %v400
    %v402 = vadd.f32 %v398, %v401
    %vm403 = vweird.f32 %v354
    %vm404 = vweird.f32 %v398
    %vm405 = vmor %vm403, %vm404
    %v406 = vsel %vm405, %v398, %v402
    %v407 = vand.u32 2147483647, %v354
    %vm408 = vcmp.eq.f32.partialorder %v407, 8.507059e+37
    %v409 = vand.u32 %v354, 2147483648
    %v410 = vor.u32 1.1754944e-38, %v409
    %v411 = vsel %vm408, %v410, %v406
    %v412 = vmul.f32 1.0, %v411
    %v413 = vrcp.pop %v355
    %v414 = vmul.f32 %v355, %v413
    %v415 = vsub.f32 1.0, %v414
    %v416 = vmul.f32 %v413, %v415
    %v417 = vadd.f32 %v413, %v416
    %vm418 = vweird.f32 %v355
    %vm419 = vweird.f32 %v413
    %vm420 = vmor %vm418, %vm419
    %v421 = vsel %vm420, %v413, %v417
    %v422 = vand.u32 2147483647, %v355
    %vm423 = vcmp.eq.f32.partialorder %v422, 8.507059e+37
    %v424 = vand.u32 %v355, 2147483648
    %v425 = vor.u32 1.1754944e-38, %v424
    %v426 = vsel %vm423, %v425, %v421
    %v427 = vmul.f32 1.0, %v426
    %v428 = vrcp.pop %v356
    %v429 = vmul.f32 %v356, %v428
    %v430 = vsub.f32 1.0, %v429
    %v431 = vmul.f32 %v428, %v430
    %v432 = vadd.f32 %v428, %v431
    %vm433 = vweird.f32 %v356
    %vm434 = vweird.f32 %v428
    %vm435 = vmor %vm433, %vm434
    %v436 = vsel %vm435, %v428, %v432
    %v437 = vand.u32 2147483647, %v356
    %vm438 = vcmp.eq.f32.partialorder %v437, 8.507059e+37
    %v439 = vand.u32 %v356, 2147483648
    %v440 = vor.u32 1.1754944e-38, %v439
    %v441 = vsel %vm438, %v440, %v436
    %v442 = vmul.f32 1.0, %v441
    %v443 = vrcp.pop %v357
    %v444 = vmul.f32 %v357, %v443
    %v445 = vsub.f32 1.0, %v444
    %v446 = vmul.f32 %v443, %v445
    %v447 = vadd.f32 %v443, %v446
    %vm448 = vweird.f32 %v357
    %vm449 = vweird.f32 %v443
    %vm450 = vmor %vm448, %vm449
    %v451 = vsel %vm450, %v443, %v447
    %v452 = vand.u32 2147483647, %v357
    %vm453 = vcmp.eq.f32.partialorder %v452, 8.507059e+37
    %v454 = vand.u32 %v357, 2147483648
    %v455 = vor.u32 1.1754944e-38, %v454
    %v456 = vsel %vm453, %v455, %v451
    %v457 = vmul.f32 1.0, %v456
    %v458 = vrcp.pop %v358
    %v459 = vmul.f32 %v358, %v458
    %v460 = vsub.f32 1.0, %v459
    %v461 = vmul.f32 %v458, %v460
    %v462 = vadd.f32 %v458, %v461
    %vm463 = vweird.f32 %v358
    %vm464 = vweird.f32 %v458
    %vm465 = vmor %vm463, %vm464
    %v466 = vsel %vm465, %v458, %v462
    %v467 = vand.u32 2147483647, %v358
    %vm468 = vcmp.eq.f32.partialorder %v467, 8.507059e+37
    %v469 = vand.u32 %v358, 2147483648
    %v470 = vor.u32 1.1754944e-38, %v469
    %v471 = vsel %vm468, %v470, %v466
    %v472 = vmul.f32 1.0, %v471
    %v473 = vrcp.pop %v359
    %v474 = vmul.f32 %v359, %v473
    %v475 = vsub.f32 1.0, %v474
    %v476 = vmul.f32 %v473, %v475
    %v477 = vadd.f32 %v473, %v476
    %vm478 = vweird.f32 %v359
    %vm479 = vweird.f32 %v473
    %vm480 = vmor %vm478, %vm479
    %v481 = vsel %vm480, %v473, %v477
    %v482 = vand.u32 2147483647, %v359
    %vm483 = vcmp.eq.f32.partialorder %v482, 8.507059e+37
    %v484 = vand.u32 %v359, 2147483648
    %v485 = vor.u32 1.1754944e-38, %v484
    %v486 = vsel %vm483, %v485, %v481
    %v487 = vmul.f32 1.0, %v486
    %v488 = vrcp.pop %v360
    %v489 = vmul.f32 %v360, %v488
    %v490 = vsub.f32 1.0, %v489
    %v491 = vmul.f32 %v488, %v490
    %v492 = vadd.f32 %v488, %v491
    %vm493 = vweird.f32 %v360
    %vm494 = vweird.f32 %v488
    %vm495 = vmor %vm493, %vm494
    %v496 = vsel %vm495, %v488, %v492
    %v497 = vand.u32 2147483647, %v360
    %vm498 = vcmp.eq.f32.partialorder %v497, 8.507059e+37
    %v499 = vand.u32 %v360, 2147483648
    %v500 = vor.u32 1.1754944e-38, %v499
    %v501 = vsel %vm498, %v500, %v496
    %v502 = vmul.f32 1.0, %v501
    %v503 = vrcp.pop %v361
    %v504 = vmul.f32 %v361, %v503
    %v505 = vsub.f32 1.0, %v504
    %v506 = vmul.f32 %v503, %v505
    %v507 = vadd.f32 %v503, %v506
    %vm508 = vweird.f32 %v361
    %vm509 = vweird.f32 %v503
    %vm510 = vmor %vm508, %vm509
    %v511 = vsel %vm510, %v503, %v507
    %v512 = vand.u32 2147483647, %v361
    %vm513 = vcmp.eq.f32.partialorder %v512, 8.507059e+37
    %v514 = vand.u32 %v361, 2147483648
    %v515 = vor.u32 1.1754944e-38, %v514
    %v516 = vsel %vm513, %v515, %v511
    %v517 = vmul.f32 1.0, %v516
    %v518 = vrcp.pop %v362
    %v519 = vmul.f32 %v362, %v518
    %v520 = vsub.f32 1.0, %v519
    %v521 = vmul.f32 %v518, %v520
    %v522 = vadd.f32 %v518, %v521
    %vm523 = vweird.f32 %v362
    %vm524 = vweird.f32 %v518
    %vm525 = vmor %vm523, %vm524
    %v526 = vsel %vm525, %v518, %v522
    %v527 = vand.u32 2147483647, %v362
    %vm528 = vcmp.eq.f32.partialorder %v527, 8.507059e+37
    %v529 = vand.u32 %v362, 2147483648
    %v530 = vor.u32 1.1754944e-38, %v529
    %v531 = vsel %vm528, %v530, %v526
    %v532 = vmul.f32 1.0, %v531
    %v533 = vrcp.pop %v363
    %v534 = vmul.f32 %v363, %v533
    %v535 = vsub.f32 1.0, %v534
    %v536 = vmul.f32 %v533, %v535
    %v537 = vadd.f32 %v533, %v536
    %vm538 = vweird.f32 %v363
    %vm539 = vweird.f32 %v533
    %vm540 = vmor %vm538, %vm539
    %v541 = vsel %vm540, %v533, %v537
    %v542 = vand.u32 2147483647, %v363
    %vm543 = vcmp.eq.f32.partialorder %v542, 8.507059e+37
    %v544 = vand.u32 %v363, 2147483648
    %v545 = vor.u32 1.1754944e-38, %v544
    %v546 = vsel %vm543, %v545, %v541
    %v547 = vmul.f32 1.0, %v546
    %v548 = vrcp.pop %v364
    %v549 = vmul.f32 %v364, %v548
    %v550 = vsub.f32 1.0, %v549
    %v551 = vmul.f32 %v548, %v550
    %v552 = vadd.f32 %v548, %v551
    %vm553 = vweird.f32 %v364
    %vm554 = vweird.f32 %v548
    %vm555 = vmor %vm553, %vm554
    %v556 = vsel %vm555, %v548, %v552
    %v557 = vand.u32 2147483647, %v364
    %vm558 = vcmp.eq.f32.partialorder %v557, 8.507059e+37
    %v559 = vand.u32 %v364, 2147483648
    %v560 = vor.u32 1.1754944e-38, %v559
    %v561 = vsel %vm558, %v560, %v556
    %v562 = vmul.f32 1.0, %v561
    %v563 = vrcp.pop %v365
    %v564 = vmul.f32 %v365, %v563
    %v565 = vsub.f32 1.0, %v564
    %v566 = vmul.f32 %v563, %v565
    %v567 = vadd.f32 %v563, %v566
    %vm568 = vweird.f32 %v365
    %vm569 = vweird.f32 %v563
    %vm570 = vmor %vm568, %vm569
    %v571 = vsel %vm570, %v563, %v567
    %v572 = vand.u32 2147483647, %v365
    %vm573 = vcmp.eq.f32.partialorder %v572, 8.507059e+37
    %v574 = vand.u32 %v365, 2147483648
    %v575 = vor.u32 1.1754944e-38, %v574
    %v576 = vsel %vm573, %v575, %v571
    %v577 = vmul.f32 1.0, %v576
    %v578 = vrcp.pop %v366
    %v579 = vmul.f32 %v366, %v578
    %v580 = vsub.f32 1.0, %v579
    %v581 = vmul.f32 %v578, %v580
    %v582 = vadd.f32 %v578, %v581
    %vm583 = vweird.f32 %v366
    %vm584 = vweird.f32 %v578
    %vm585 = vmor %vm583, %vm584
    %v586 = vsel %vm585, %v578, %v582
    %v587 = vand.u32 2147483647, %v366
    %vm588 = vcmp.eq.f32.partialorder %v587, 8.507059e+37
    %v589 = vand.u32 %v366, 2147483648
    %v590 = vor.u32 1.1754944e-38, %v589
    %v591 = vsel %vm588, %v590, %v586
    %v592 = vmul.f32 1.0, %v591
    %v593 = vrcp.pop %v367
    %v594 = vmul.f32 %v367, %v593
    %v595 = vsub.f32 1.0, %v594
    %v596 = vmul.f32 %v593, %v595
    %v597 = vadd.f32 %v593, %v596
    %vm598 = vweird.f32 %v367
    %vm599 = vweird.f32 %v593
    %vm600 = vmor %vm598, %vm599
    %v601 = vsel %vm600, %v593, %v597
    %v602 = vand.u32 2147483647, %v367
    %vm603 = vcmp.eq.f32.partialorder %v602, 8.507059e+37
    %v604 = vand.u32 %v367, 2147483648
    %v605 = vor.u32 1.1754944e-38, %v604
    %v606 = vsel %vm603, %v605, %v601
    %v607 = vmul.f32 1.0, %v606
    %v608 = vmul.f32 %v288, %v382
    %v609 = vmul.f32 %v289, %v397
    %v610 = vmul.f32 %v290, %v412
    %v611 = vmul.f32 %v291, %v427
    %v612 = vmul.f32 %v292, %v442
    %v613 = vmul.f32 %v293, %v457
    %v614 = vmul.f32 %v294, %v472
    %v615 = vmul.f32 %v295, %v487
    %v616 = vmul.f32 %v296, %v502
    %v617 = vmul.f32 %v297, %v517
    %v618 = vmul.f32 %v298, %v532
    %v619 = vmul.f32 %v299, %v547
    %v620 = vmul.f32 %v300, %v562
    %v621 = vmul.f32 %v301, %v577
    %v622 = vmul.f32 %v302, %v592
    %v623 = vmul.f32 %v303, %v607
    %624 = vst.msk [vmem:[#allocation2] sm:$0xff] %vm56, %v608
    %625 = vst.msk [vmem:[#allocation2 + $0x8] sm:$0xff] %vm56, %v609
    %626 = vst.msk [vmem:[#allocation2 + $0x10] sm:$0xff] %vm56, %v610
    %627 = vst.msk [vmem:[#allocation2 + $0x18] sm:$0xff] %vm56, %v611
    %628 = vst.msk [vmem:[#allocation2 + $0x20] sm:$0xff] %vm56, %v612
    %629 = vst.msk [vmem:[#allocation2 + $0x28] sm:$0xff] %vm56, %v613
    %630 = vst.msk [vmem:[#allocation2 + $0x30] sm:$0xff] %vm56, %v614
    %631 = vst.msk [vmem:[#allocation2 + $0x38] sm:$0xff] %vm56, %v615
    %632 = vst.msk [vmem:[#allocation2 + $0x40] sm:$0xff] %vm56, %v616
    %633 = vst.msk [vmem:[#allocation2 + $0x48] sm:$0xff] %vm56, %v617
    %634 = vst.msk [vmem:[#allocation2 + $0x50] sm:$0xff] %vm56, %v618
    %635 = vst.msk [vmem:[#allocation2 + $0x58] sm:$0xff] %vm56, %v619
    %636 = vst.msk [vmem:[#allocation2 + $0x60] sm:$0xff] %vm56, %v620
    %637 = vst.msk [vmem:[#allocation2 + $0x68] sm:$0xff] %vm56, %v621
    %638 = vst.msk [vmem:[#allocation2 + $0x70] sm:$0xff] %vm56, %v622
    %639 = vst.msk [vmem:[#allocation2 + $0x78] sm:$0xff] %vm56, %v623
    // Predicated region
    $region22: #{cot3_forward.5} parent=1 // pred_check
      _
    $region23: #{cot3_forward.5} parent=1 // pred_check_branch
      %641 = sbr.rel (0) target = $region25
    $region24: #{cot3_forward.5} parent=1 // pred_region
      %643 = vsyncadd [#allocation3], 0
      %s644 = sshll.u32 [#allocation2], 4
      %s645 = int_to_ptr.vmem [resolvable:$true] %s644
      %s646 = sshll.u32 %s5, 4
      %s647 = int_to_ptr.hbm [resolvable:$true] %s646
      %652 = dma.vmem_to_hbm [thread:$0]  %s645, 2048, %s647, [#allocation3], 128, 128, 8
    $region25: #{cot3_forward.5} parent=1 // pred_fallthru
      _
    // Predicated region
    $region26: #{cot3_forward.5} parent=1 // pred_check
      _
    $region27: #{cot3_forward.5} parent=1 // pred_check_branch
      %654 = sbr.rel (0) target = $region29
    $region28: #{cot3_forward.5} parent=1 // pred_region
      %656 = dma.done [#allocation3], 2048
    $region29: #{cot3_forward.5} parent=1 // pred_fallthru
      _
    %657 = vsyncpa [#allocation3], 1

// kernel: cot3_forward.4
$region0: #{cot3_forward.4}
  #allocation0 [shape = 'u32[]', space=smem, size = 0x4, offset = 0x4, fixed_abs, tag = 'smem constant byte address 0x4 - core index']
  #allocation1 [shape = 'u32[72,128]{1,0:T(1,128)}', space=vmem, size = 0x9000, scoped, tag = 'internal scratch']
  %s0 = inlined_call_operand.vmem [shape: f32[2,64,16], index: 0, kind: input, shape index: {}]
  %s1 = inlined_call_operand.vmem [shape: f32[8,8], index: 1, kind: input, shape index: {}]
  %s2 = inlined_call_operand.vmem [shape: f32[1,8], index: 2, kind: input, shape index: {}]
  %s3 = inlined_call_operand.vmem [shape: f32[72,8], index: 3, kind: input, shape index: {}]
  %s4 = inlined_call_operand.vmem [shape: f32[1,8], index: 4, kind: input, shape index: {}]
  %s5 = inlined_call_operand.vmem [shape: f32[8,8], index: 5, kind: input, shape index: {}]
  %s6 = inlined_call_operand.vmem [shape: f32[1,8], index: 6, kind: input, shape index: {}]
  %s7 = inlined_call_operand.vmem [shape: f32[8,4], index: 7, kind: input, shape index: {}]
  %s8 = inlined_call_operand.vmem [shape: f32[8,4], index: 8, kind: input, shape index: {}]
  %s9 = inlined_call_operand.vmem [shape: f32[1,4], index: 9, kind: input, shape index: {}]
  %s10 = inlined_call_operand.vmem [shape: f32[4,8], index: 10, kind: input, shape index: {}]
  %s11 = inlined_call_operand.vmem [shape: f32[1,8], index: 11, kind: input, shape index: {}]
  %s12 = inlined_call_operand.vmem [shape: f32[2,64,8], index: 12, kind: output, shape index: {}]
  %s13 = sld [smem:[#allocation0]]
  $region81: #{cot3_forward.4} parent=0
    _
  %s15 = ssub.s32 1, %s13
  %s16 = scalar_select 0, %s15, %s13
  loop: start=0, step=1, limit=4
  $region2: #{cot3_forward.4} parent=0 // loop_pre_header
    _
  $region3: #{cot3_forward.4} parent=0 // loop_header
    %s18 = sphi 0, %s22
    %p19 = scmp.ge.s32.totalorder %s18, 4
    %s28 = sphi 0, %s30
    %s31 = sphi 0, %s28
    %s32 = sphi 0, %s31
    %s48 = sphi 0, %s32
    %s52 = sphi 0, %s52
    %s54 = sphi 0, %s52
    %s55 = sphi 0, %s54
    %s69 = sphi 0, %s55
    %s73 = sphi 0, %s73
    %s75 = sphi 0, %s73
    %s76 = sphi 0, %s75
    %s90 = sphi 0, %s76
    %s94 = sphi 0, %s94
    %s96 = sphi 0, %s94
    %s97 = sphi 0, %s96
    %s111 = sphi 0, %s97
    %s115 = sphi 0, %s115
    %s117 = sphi 0, %s115
    %s118 = sphi 0, %s117
    %s132 = sphi 0, %s118
    %s136 = sphi 0, %s136
    %s138 = sphi 0, %s136
    %s139 = sphi 0, %s138
    %s153 = sphi 0, %s139
    %s157 = sphi 0, %s157
    %s159 = sphi 0, %s157
    %s160 = sphi 0, %s159
    %s174 = sphi 0, %s160
    %s178 = sphi 0, %s178
    %s180 = sphi 0, %s178
    %s181 = sphi 0, %s180
    %s195 = sphi 0, %s181
    %s199 = sphi 0, %s199
    %s201 = sphi 0, %s199
    %s202 = sphi 0, %s201
    %s216 = sphi 0, %s202
    %s220 = sphi 0, %s220
    %s222 = sphi 0, %s220
    %s223 = sphi 0, %s222
    %s237 = sphi 0, %s223
    %s241 = sphi 0, %s241
    %s243 = sphi 0, %s241
    %s244 = sphi 0, %s243
    %s258 = sphi 0, %s244
    %s262 = sphi 0, %s262
    %s264 = sphi 0, %s262
    %s265 = sphi 0, %s264
    %s279 = sphi 0, %s265
    %s285 = sphi 0, %s287
    %s288 = sphi 0, %s285
    %s289 = sphi 0, %s288
    %s305 = sphi 0, %s289
  $region4: #{cot3_forward.4} parent=0 // loop_header_branch
    %21 = sbr.rel (%p19) target = $region8
  $region5: #{cot3_forward.4} parent=0 // loop_body
    %s23 = ssub.s32 %s18, 1
    %s24 = ssub.s32 %s18, 2
    %s25 = sadd.s32 %s18, 1
    %s26 = ssub.s32 %s18, %s25
    %p27 = scmp.eq.s32.totalorder %s26, 0
    %s29 = sadd.s32 %s28, 1
    %s30 = scalar_select %p27, %s28, %s29
    %p33 = pneg %p27
    %p34 = scmp.eq.s32.totalorder %s18, 1
    %p35 = por %p33, %p34
    %p36 = scmp.ne.s32.totalorder %s28, %s31
    %p37 = scmp.eq.s32.totalorder %s18, 0
    %p38 = por %p36, %p37
    %p39 = scmp.ne.s32.totalorder %s28, %s31
    %p40 = scmp.eq.s32.totalorder %s23, 1
    %p41 = por %p39, %p40
    %p42 = scmp.ne.s32.totalorder %s31, %s32
    %p43 = scmp.eq.s32.totalorder %s23, 0
    %p44 = por %p42, %p43
    %p45 = scmp.ne.s32.totalorder %s31, %s32
    %p46 = scmp.eq.s32.totalorder %s24, 1
    %p47 = por %p45, %p46
    %p49 = scmp.ne.s32.totalorder %s32, %s48
    %p50 = scmp.eq.s32.totalorder %s24, 0
    %p51 = por %p49, %p50
    %s53 = sadd.s32 %s52, 1
    %p56 = scmp.eq.s32.totalorder %s18, 1
    %p57 = scmp.ne.s32.totalorder %s52, %s54
    %p58 = scmp.eq.s32.totalorder %s18, 0
    %p59 = por %p57, %p58
    %p60 = scmp.ne.s32.totalorder %s52, %s54
    %p61 = scmp.eq.s32.totalorder %s23, 1
    %p62 = por %p60, %p61
    %p63 = scmp.ne.s32.totalorder %s54, %s55
    %p64 = scmp.eq.s32.totalorder %s23, 0
    %p65 = por %p63, %p64
    %p66 = scmp.ne.s32.totalorder %s54, %s55
    %p67 = scmp.eq.s32.totalorder %s24, 1
    %p68 = por %p66, %p67
    %p70 = scmp.ne.s32.totalorder %s55, %s69
    %p71 = scmp.eq.s32.totalorder %s24, 0
    %p72 = por %p70, %p71
    %s74 = sadd.s32 %s73, 1
    %p77 = scmp.eq.s32.totalorder %s18, 1
    %p78 = scmp.ne.s32.totalorder %s73, %s75
    %p79 = scmp.eq.s32.totalorder %s18, 0
    %p80 = por %p78, %p79
    %p81 = scmp.ne.s32.totalorder %s73, %s75
    %p82 = scmp.eq.s32.totalorder %s23, 1
    %p83 = por %p81, %p82
    %p84 = scmp.ne.s32.totalorder %s75, %s76
    %p85 = scmp.eq.s32.totalorder %s23, 0
    %p86 = por %p84, %p85
    %p87 = scmp.ne.s32.totalorder %s75, %s76
    %p88 = scmp.eq.s32.totalorder %s24, 1
    %p89 = por %p87, %p88
    %p91 = scmp.ne.s32.totalorder %s76, %s90
    %p92 = scmp.eq.s32.totalorder %s24, 0
    %p93 = por %p91, %p92
    %s95 = sadd.s32 %s94, 1
    %p98 = scmp.eq.s32.totalorder %s18, 1
    %p99 = scmp.ne.s32.totalorder %s94, %s96
    %p100 = scmp.eq.s32.totalorder %s18, 0
    %p101 = por %p99, %p100
    %p102 = scmp.ne.s32.totalorder %s94, %s96
    %p103 = scmp.eq.s32.totalorder %s23, 1
    %p104 = por %p102, %p103
    %p105 = scmp.ne.s32.totalorder %s96, %s97
    %p106 = scmp.eq.s32.totalorder %s23, 0
    %p107 = por %p105, %p106
    %p108 = scmp.ne.s32.totalorder %s96, %s97
    %p109 = scmp.eq.s32.totalorder %s24, 1
    %p110 = por %p108, %p109
    %p112 = scmp.ne.s32.totalorder %s97, %s111
    %p113 = scmp.eq.s32.totalorder %s24, 0
    %p114 = por %p112, %p113
    %s116 = sadd.s32 %s115, 1
    %p119 = scmp.eq.s32.totalorder %s18, 1
    %p120 = scmp.ne.s32.totalorder %s115, %s117
    %p121 = scmp.eq.s32.totalorder %s18, 0
    %p122 = por %p120, %p121
    %p123 = scmp.ne.s32.totalorder %s115, %s117
    %p124 = scmp.eq.s32.totalorder %s23, 1
    %p125 = por %p123, %p124
    %p126 = scmp.ne.s32.totalorder %s117, %s118
    %p127 = scmp.eq.s32.totalorder %s23, 0
    %p128 = por %p126, %p127
    %p129 = scmp.ne.s32.totalorder %s117, %s118
    %p130 = scmp.eq.s32.totalorder %s24, 1
    %p131 = por %p129, %p130
    %p133 = scmp.ne.s32.totalorder %s118, %s132
    %p134 = scmp.eq.s32.totalorder %s24, 0
    %p135 = por %p133, %p134
    %s137 = sadd.s32 %s136, 1
    %p140 = scmp.eq.s32.totalorder %s18, 1
    %p141 = scmp.ne.s32.totalorder %s136, %s138
    %p142 = scmp.eq.s32.totalorder %s18, 0
    %p143 = por %p141, %p142
    %p144 = scmp.ne.s32.totalorder %s136, %s138
    %p145 = scmp.eq.s32.totalorder %s23, 1
    %p146 = por %p144, %p145
    %p147 = scmp.ne.s32.totalorder %s138, %s139
    %p148 = scmp.eq.s32.totalorder %s23, 0
    %p149 = por %p147, %p148
    %p150 = scmp.ne.s32.totalorder %s138, %s139
    %p151 = scmp.eq.s32.totalorder %s24, 1
    %p152 = por %p150, %p151
    %p154 = scmp.ne.s32.totalorder %s139, %s153
    %p155 = scmp.eq.s32.totalorder %s24, 0
    %p156 = por %p154, %p155
    %s158 = sadd.s32 %s157, 1
    %p161 = scmp.eq.s32.totalorder %s18, 1
    %p162 = scmp.ne.s32.totalorder %s157, %s159
    %p163 = scmp.eq.s32.totalorder %s18, 0
    %p164 = por %p162, %p163
    %p165 = scmp.ne.s32.totalorder %s157, %s159
    %p166 = scmp.eq.s32.totalorder %s23, 1
    %p167 = por %p165, %p166
    %p168 = scmp.ne.s32.totalorder %s159, %s160
    %p169 = scmp.eq.s32.totalorder %s23, 0
    %p170 = por %p168, %p169
    %p171 = scmp.ne.s32.totalorder %s159, %s160
    %p172 = scmp.eq.s32.totalorder %s24, 1
    %p173 = por %p171, %p172
    %p175 = scmp.ne.s32.totalorder %s160, %s174
    %p176 = scmp.eq.s32.totalorder %s24, 0
    %p177 = por %p175, %p176
    %s179 = sadd.s32 %s178, 1
    %p182 = scmp.eq.s32.totalorder %s18, 1
    %p183 = scmp.ne.s32.totalorder %s178, %s180
    %p184 = scmp.eq.s32.totalorder %s18, 0
    %p185 = por %p183, %p184
    %p186 = scmp.ne.s32.totalorder %s178, %s180
    %p187 = scmp.eq.s32.totalorder %s23, 1
    %p188 = por %p186, %p187
    %p189 = scmp.ne.s32.totalorder %s180, %s181
    %p190 = scmp.eq.s32.totalorder %s23, 0
    %p191 = por %p189, %p190
    %p192 = scmp.ne.s32.totalorder %s180, %s181
    %p193 = scmp.eq.s32.totalorder %s24, 1
    %p194 = por %p192, %p193
    %p196 = scmp.ne.s32.totalorder %s181, %s195
    %p197 = scmp.eq.s32.totalorder %s24, 0
    %p198 = por %p196, %p197
    %s200 = sadd.s32 %s199, 1
    %p203 = scmp.eq.s32.totalorder %s18, 1
    %p204 = scmp.ne.s32.totalorder %s199, %s201
    %p205 = scmp.eq.s32.totalorder %s18, 0
    %p206 = por %p204, %p205
    %p207 = scmp.ne.s32.totalorder %s199, %s201
    %p208 = scmp.eq.s32.totalorder %s23, 1
    %p209 = por %p207, %p208
    %p210 = scmp.ne.s32.totalorder %s201, %s202
    %p211 = scmp.eq.s32.totalorder %s23, 0
    %p212 = por %p210, %p211
    %p213 = scmp.ne.s32.totalorder %s201, %s202
    %p214 = scmp.eq.s32.totalorder %s24, 1
    %p215 = por %p213, %p214
    %p217 = scmp.ne.s32.totalorder %s202, %s216
    %p218 = scmp.eq.s32.totalorder %s24, 0
    %p219 = por %p217, %p218
    %s221 = sadd.s32 %s220, 1
    %p224 = scmp.eq.s32.totalorder %s18, 1
    %p225 = scmp.ne.s32.totalorder %s220, %s222
    %p226 = scmp.eq.s32.totalorder %s18, 0
    %p227 = por %p225, %p226
    %p228 = scmp.ne.s32.totalorder %s220, %s222
    %p229 = scmp.eq.s32.totalorder %s23, 1
    %p230 = por %p228, %p229
    %p231 = scmp.ne.s32.totalorder %s222, %s223
    %p232 = scmp.eq.s32.totalorder %s23, 0
    %p233 = por %p231, %p232
    %p234 = scmp.ne.s32.totalorder %s222, %s223
    %p235 = scmp.eq.s32.totalorder %s24, 1
    %p236 = por %p234, %p235
    %p238 = scmp.ne.s32.totalorder %s223, %s237
    %p239 = scmp.eq.s32.totalorder %s24, 0
    %p240 = por %p238, %p239
    %s242 = sadd.s32 %s241, 1
    %p245 = scmp.eq.s32.totalorder %s18, 1
    %p246 = scmp.ne.s32.totalorder %s241, %s243
    %p247 = scmp.eq.s32.totalorder %s18, 0
    %p248 = por %p246, %p247
    %p249 = scmp.ne.s32.totalorder %s241, %s243
    %p250 = scmp.eq.s32.totalorder %s23, 1
    %p251 = por %p249, %p250
    %p252 = scmp.ne.s32.totalorder %s243, %s244
    %p253 = scmp.eq.s32.totalorder %s23, 0
    %p254 = por %p252, %p253
    %p255 = scmp.ne.s32.totalorder %s243, %s244
    %p256 = scmp.eq.s32.totalorder %s24, 1
    %p257 = por %p255, %p256
    %p259 = scmp.ne.s32.totalorder %s244, %s258
    %p260 = scmp.eq.s32.totalorder %s24, 0
    %p261 = por %p259, %p260
    %s263 = sadd.s32 %s262, 1
    %p266 = scmp.eq.s32.totalorder %s18, 1
    %p267 = scmp.ne.s32.totalorder %s262, %s264
    %p268 = scmp.eq.s32.totalorder %s18, 0
    %p269 = por %p267, %p268
    %p270 = scmp.ne.s32.totalorder %s262, %s264
    %p271 = scmp.eq.s32.totalorder %s23, 1
    %p272 = por %p270, %p271
    %p273 = scmp.ne.s32.totalorder %s264, %s265
    %p274 = scmp.eq.s32.totalorder %s23, 0
    %p275 = por %p273, %p274
    %p276 = scmp.ne.s32.totalorder %s264, %s265
    %p277 = scmp.eq.s32.totalorder %s24, 1
    %p278 = por %p276, %p277
    %p280 = scmp.ne.s32.totalorder %s265, %s279
    %p281 = scmp.eq.s32.totalorder %s24, 0
    %p282 = por %p280, %p281
    %s283 = ssub.s32 %s18, %s25
    %p284 = scmp.eq.s32.totalorder %s283, 0
    %s286 = sadd.s32 %s285, 1
    %s287 = scalar_select %p284, %s285, %s286
    %p290 = pneg %p284
    %p291 = scmp.eq.s32.totalorder %s18, 1
    %p292 = por %p290, %p291
    %p293 = scmp.ne.s32.totalorder %s285, %s288
    %p294 = scmp.eq.s32.totalorder %s18, 0
    %p295 = por %p293, %p294
    %p296 = scmp.ne.s32.totalorder %s285, %s288
    %p297 = scmp.eq.s32.totalorder %s23, 1
    %p298 = por %p296, %p297
    %p299 = scmp.ne.s32.totalorder %s288, %s289
    %p300 = scmp.eq.s32.totalorder %s23, 0
    %p301 = por %p299, %p300
    %p302 = scmp.ne.s32.totalorder %s288, %s289
    %p303 = scmp.eq.s32.totalorder %s24, 1
    %p304 = por %p302, %p303
    %p306 = scmp.ne.s32.totalorder %s289, %s305
    %p307 = scmp.eq.s32.totalorder %s24, 0
    %p308 = por %p306, %p307
    %p309 = scmp.le.s32.totalorder 1, %s18
    %p310 = scmp.lt.s32.totalorder %s18, 3
    %p311 = pnand %p309, %p310
    %p312 = pneg %p311
    // Predicated region
    $region9: #{cot3_forward.4} parent=5 // pred_check
      _
    $region10: #{cot3_forward.4} parent=5 // pred_check_branch
      %314 = sbr.rel (%p311) target = $region12
    $region11: #{cot3_forward.4} parent=5 // pred_region
      %s315 = ssub.s32 %s18, 1
      // Predicated region
      $region13: #{cot3_forward.4} parent=11 // pred_check
        %p316 = pneg %p65
      $region14: #{cot3_forward.4} parent=11 // pred_check_branch
        %318 = sbr.rel (%p316) target = $region16
      $region15: #{cot3_forward.4} parent=11 // pred_region
        _
      $region16: #{cot3_forward.4} parent=11 // pred_fallthru
        _
      // Predicated region
      $region17: #{cot3_forward.4} parent=11 // pred_check
        %p319 = pneg %p86
      $region18: #{cot3_forward.4} parent=11 // pred_check_branch
        %321 = sbr.rel (%p319) target = $region20
      $region19: #{cot3_forward.4} parent=11 // pred_region
        _
      $region20: #{cot3_forward.4} parent=11 // pred_fallthru
        _
      // Predicated region
      $region21: #{cot3_forward.4} parent=11 // pred_check
        %p322 = pneg %p107
      $region22: #{cot3_forward.4} parent=11 // pred_check_branch
        %324 = sbr.rel (%p322) target = $region24
      $region23: #{cot3_forward.4} parent=11 // pred_region
        _
      $region24: #{cot3_forward.4} parent=11 // pred_fallthru
        _
      // Predicated region
      $region25: #{cot3_forward.4} parent=11 // pred_check
        %p325 = pneg %p128
      $region26: #{cot3_forward.4} parent=11 // pred_check_branch
        %327 = sbr.rel (%p325) target = $region28
      $region27: #{cot3_forward.4} parent=11 // pred_region
        _
      $region28: #{cot3_forward.4} parent=11 // pred_fallthru
        _
      // Predicated region
      $region29: #{cot3_forward.4} parent=11 // pred_check
        %p328 = pneg %p149
      $region30: #{cot3_forward.4} parent=11 // pred_check_branch
        %330 = sbr.rel (%p328) target = $region32
      $region31: #{cot3_forward.4} parent=11 // pred_region
        _
      $region32: #{cot3_forward.4} parent=11 // pred_fallthru
        _
      // Predicated region
      $region33: #{cot3_forward.4} parent=11 // pred_check
        %p331 = pneg %p170
      $region34: #{cot3_forward.4} parent=11 // pred_check_branch
        %333 = sbr.rel (%p331) target = $region36
      $region35: #{cot3_forward.4} parent=11 // pred_region
        _
      $region36: #{cot3_forward.4} parent=11 // pred_fallthru
        _
      // Predicated region
      $region37: #{cot3_forward.4} parent=11 // pred_check
        %p334 = pneg %p191
      $region38: #{cot3_forward.4} parent=11 // pred_check_branch
        %336 = sbr.rel (%p334) target = $region40
      $region39: #{cot3_forward.4} parent=11 // pred_region
        _
      $region40: #{cot3_forward.4} parent=11 // pred_fallthru
        _
      // Predicated region
      $region41: #{cot3_forward.4} parent=11 // pred_check
        %p337 = pneg %p212
      $region42: #{cot3_forward.4} parent=11 // pred_check_branch
        %339 = sbr.rel (%p337) target = $region44
      $region43: #{cot3_forward.4} parent=11 // pred_region
        _
      $region44: #{cot3_forward.4} parent=11 // pred_fallthru
        _
      // Predicated region
      $region45: #{cot3_forward.4} parent=11 // pred_check
        %p340 = pneg %p233
      $region46: #{cot3_forward.4} parent=11 // pred_check_branch
        %342 = sbr.rel (%p340) target = $region48
      $region47: #{cot3_forward.4} parent=11 // pred_region
        _
      $region48: #{cot3_forward.4} parent=11 // pred_fallthru
        _
      // Predicated region
      $region49: #{cot3_forward.4} parent=11 // pred_check
        %p343 = pneg %p254
      $region50: #{cot3_forward.4} parent=11 // pred_check_branch
        %345 = sbr.rel (%p343) target = $region52
      $region51: #{cot3_forward.4} parent=11 // pred_region
        _
      $region52: #{cot3_forward.4} parent=11 // pred_fallthru
        _
      // Predicated region
      $region53: #{cot3_forward.4} parent=11 // pred_check
        %p346 = pneg %p275
      $region54: #{cot3_forward.4} parent=11 // pred_check_branch
        %348 = sbr.rel (%p346) target = $region56
      $region55: #{cot3_forward.4} parent=11 // pred_region
        _
      $region56: #{cot3_forward.4} parent=11 // pred_fallthru
        _
    $region12: #{cot3_forward.4} parent=5 // pred_fallthru
      _
    %p349 = scmp.lt.s32.totalorder %s18, 2
    // Predicated region
    $region57: #{cot3_forward.4} parent=5 // pred_check
      %p350 = pneg %p349
    $region58: #{cot3_forward.4} parent=5 // pred_check_branch
      %352 = sbr.rel (%p350) target = $region60
    $region59: #{cot3_forward.4} parent=5 // pred_region
      // Predicated region
      $region61: #{cot3_forward.4} parent=59 // pred_check
        %p353 = pneg %p38
      $region62: #{cot3_forward.4} parent=59 // pred_check_branch
        %355 = sbr.rel (%p353) target = $region64
      $region63: #{cot3_forward.4} parent=59 // pred_region
        %p356 = scmp.lt.s32.totalorder %s18, 1
        %s357 = scalar_select %p356, %s18, 1
        %s358 = smul.addr %s357, 8
        %s359 = smul.addr %s358, 8
        %s360 = scalar_lea.vmem %s0, %s359
      $region64: #{cot3_forward.4} parent=59 // pred_fallthru
        _
    $region60: #{cot3_forward.4} parent=5 // pred_fallthru
      _
    %p361 = scmp.le.s32.totalorder 1, %s18
    %p362 = scmp.lt.s32.totalorder %s18, 3
    %p363 = pnand %p361, %p362
    %p364 = pneg %p363
    // Predicated region
    $region65: #{cot3_forward.4} parent=5 // pred_check
      _
    $region66: #{cot3_forward.4} parent=5 // pred_check_branch
      %366 = sbr.rel (%p363) target = $region68
    $region67: #{cot3_forward.4} parent=5 // pred_region
      %s367 = ssub.s32 %s18, 1
      %p368 = scmp.lt.s32.totalorder %s23, 1
      %s369 = scalar_select %p368, %s23, 1
      %s370 = smul.addr %s369, 8
      %s371 = smul.addr %s370, 8
      %s372 = scalar_lea.vmem %s0, %s371
      %p373 = pneg %p44
      %p374 = pneg %p41
      %p375 = pneg %p65
      %p376 = pneg %p62
      %p377 = pneg %p86
      %p378 = pneg %p83
      %p379 = pneg %p107
      %p380 = pneg %p104
      %p381 = pneg %p128
      %p382 = pneg %p125
      %p383 = pneg %p149
      %p384 = pneg %p146
      %p385 = pneg %p170
      %p386 = pneg %p167
      %p387 = pneg %p191
      %p388 = pneg %p188
      %p389 = pneg %p212
      %p390 = pneg %p209
      %p391 = pneg %p233
      %p392 = pneg %p230
      %p393 = pneg %p254
      %p394 = pneg %p251
      %p395 = pneg %p275
      %p396 = pneg %p272
      %p397 = pneg %p301
      %p398 = pneg %p298
      %p399 = scmp.lt.s32.totalorder %s23, 1
      %s400 = scalar_select %p399, %s23, 1
      %s401 = smul.addr %s400, 8
      %s402 = smul.addr %s401, 8
      %s403 = scalar_lea.vmem %s12, %s402
      %p404 = scmp.lt.s32.totalorder %s23, 1
      %s405 = scalar_select %p404, %s23, 1
      %s406 = smul.addr %s405, 8
      %s407 = smul.addr %s406, 8
      %s408 = scalar_lea.vmem %s0, %s407
      %p409 = scmp.lt.s32.totalorder %s23, 1
      %s410 = scalar_select %p409, %s23, 1
      %s411 = smul.addr %s410, 8
      %s412 = smul.addr %s411, 8
      %s413 = scalar_lea.vmem %s12, %s412
      %v414 = vld [vmem:[%s408] sm:$0xff]
      %v415 = vld [vmem:[%s408 + $0x8] sm:$0xff]
      %v416 = vld [vmem:[%s408 + $0x10] sm:$0xff]
      %v417 = vld [vmem:[%s408 + $0x18] sm:$0xff]
      %v418 = vld [vmem:[%s408 + $0x20] sm:$0xff]
      %v419 = vld [vmem:[%s408 + $0x28] sm:$0xff]
      %v420 = vld [vmem:[%s408 + $0x30] sm:$0xff]
      %v421 = vld [vmem:[%s408 + $0x38] sm:$0xff]
      %v422 = vld [vmem:[%s1] sm:$0xff]
      %v423 = vld [vmem:[%s2] sm:$0x1]
      %v425 = vperm.slane %v423, 0
      %vm427 = vcmask 64512
      %v429 = vsel %vm427, %v414, 0
      %v432 = vsel %vm427, %v415, 0
      %v435 = vsel %vm427, %v416, 0
      %v438 = vsel %vm427, %v417, 0
      %v441 = vsel %vm427, %v418, 0
      %v444 = vsel %vm427, %v419, 0
      %v447 = vsel %vm427, %v420, 0
      %v450 = vsel %vm427, %v421, 0
      %452 = vmatpush.msra.mxu0 0.0
      %453 = vmatpush.msra.mxu0 0.0
      %454 = vmatpush.msra.mxu0 0.0
      %455 = vmatpush.msra.mxu0 0.0
      %456 = vmatpush.msra.mxu0 0.0
      %457 = vmatpush.msra.mxu0 0.0
      %458 = vmatpush.msra.mxu0 0.0
      %459 = vmatpush.msra.mxu0 0.0
      %460 = vmatpush.msra.mxu0 0.0
      %461 = vmatpush.msra.mxu0 0.0
      %462 = vmatpush.msra.mxu0 0.0
      %463 = vmatpush.msra.mxu0 0.0
      %464 = vmatpush.msra.mxu0 0.0
      %465 = vmatpush.msra.mxu0 0.0
      %466 = vmatpush.msra.mxu0 0.0
      %467 = vmatpush.msra.mxu0 %v422
      %468 = vmatmul.f32.gmra.mxu0 %v429
      %v469 = vpop.f32.mrf.mxu0
      %v470 = vadd.f32 %v425, %v469
      %471 = vmatmul.f32.gmra.mxu0 %v432
      %v472 = vpop.f32.mrf.mxu0
      %v473 = vadd.f32 %v425, %v472
      %474 = vmatmul.f32.gmra.mxu0 %v435
      %v475 = vpop.f32.mrf.mxu0
      %v476 = vadd.f32 %v425, %v475
      %477 = vmatmul.f32.gmra.mxu0 %v438
      %v478 = vpop.f32.mrf.mxu0
      %v479 = vadd.f32 %v425, %v478
      %480 = vmatmul.f32.gmra.mxu0 %v441
      %v481 = vpop.f32.mrf.mxu0
      %v482 = vadd.f32 %v425, %v481
      %483 = vmatmul.f32.gmra.mxu0 %v444
      %v484 = vpop.f32.mrf.mxu0
      %v485 = vadd.f32 %v425, %v484
      %486 = vmatmul.f32.gmra.mxu0 %v447
      %v487 = vpop.f32.mrf.mxu0
      %v488 = vadd.f32 %v425, %v487
      %489 = vmatmul.f32.gmra.mxu0 %v450
      %v490 = vpop.f32.mrf.mxu0
      %v491 = vadd.f32 %v425, %v490
      %492 = vdwg.mxu0
      %v493 = vsub.f32 0.0, %v470
      %v494 = vsub.f32 0.0, %v473
      %v495 = vsub.f32 0.0, %v476
      %v496 = vsub.f32 0.0, %v479
      %v497 = vsub.f32 0.0, %v482
      %v498 = vsub.f32 0.0, %v485
      %v499 = vsub.f32 0.0, %v488
      %v500 = vsub.f32 0.0, %v491
      %v501 = vmul.f32 %v493, 1.442695
      %v502 = vpow.pop %v501
      %v503 = vmul.f32 %v494, 1.442695
      %v504 = vpow.pop %v503
      %v505 = vmul.f32 %v495, 1.442695
      %v506 = vpow.pop %v505
      %v507 = vmul.f32 %v496, 1.442695
      %v508 = vpow.pop %v507
      %v509 = vmul.f32 %v497, 1.442695
      %v510 = vpow.pop %v509
      %v511 = vmul.f32 %v498, 1.442695
      %v512 = vpow.pop %v511
      %v513 = vmul.f32 %v499, 1.442695
      %v514 = vpow.pop %v513
      %v515 = vmul.f32 %v500, 1.442695
      %v516 = vpow.pop %v515
      %v517 = vadd.f32 %v502, 1.0
      %v518 = vadd.f32 %v504, 1.0
      %v519 = vadd.f32 %v506, 1.0
      %v520 = vadd.f32 %v508, 1.0
      %v521 = vadd.f32 %v510, 1.0
      %v522 = vadd.f32 %v512, 1.0
      %v523 = vadd.f32 %v514, 1.0
      %v524 = vadd.f32 %v516, 1.0
      %v525 = vrcp.pop %v517
      %v526 = vmul.f32 %v517, %v525
      %v527 = vsub.f32 1.0, %v526
      %v528 = vmul.f32 %v525, %v527
      %v529 = vadd.f32 %v525, %v528
      %vm530 = vweird.f32 %v517
      %vm531 = vweird.f32 %v525
      %vm532 = vmor %vm530, %vm531
      %v533 = vsel %vm532, %v525, %v529
      %v534 = vand.u32 2147483647, %v517
      %vm535 = vcmp.eq.f32.partialorder %v534, 8.507059e+37
      %v536 = vand.u32 %v517, 2147483648
      %v537 = vor.u32 1.1754944e-38, %v536
      %v538 = vsel %vm535, %v537, %v533
      %v539 = vmul.f32 1.0, %v538
      %v540 = vrcp.pop %v518
      %v541 = vmul.f32 %v518, %v540
      %v542 = vsub.f32 1.0, %v541
      %v543 = vmul.f32 %v540, %v542
      %v544 = vadd.f32 %v540, %v543
      %vm545 = vweird.f32 %v518
      %vm546 = vweird.f32 %v540
      %vm547 = vmor %vm545, %vm546
      %v548 = vsel %vm547, %v540, %v544
      %v549 = vand.u32 2147483647, %v518
      %vm550 = vcmp.eq.f32.partialorder %v549, 8.507059e+37
      %v551 = vand.u32 %v518, 2147483648
      %v552 = vor.u32 1.1754944e-38, %v551
      %v553 = vsel %vm550, %v552, %v548
      %v554 = vmul.f32 1.0, %v553
      %v555 = vrcp.pop %v519
      %v556 = vmul.f32 %v519, %v555
      %v557 = vsub.f32 1.0, %v556
      %v558 = vmul.f32 %v555, %v557
      %v559 = vadd.f32 %v555, %v558
      %vm560 = vweird.f32 %v519
      %vm561 = vweird.f32 %v555
      %vm562 = vmor %vm560, %vm561
      %v563 = vsel %vm562, %v555, %v559
      %v564 = vand.u32 2147483647, %v519
      %vm565 = vcmp.eq.f32.partialorder %v564, 8.507059e+37
      %v566 = vand.u32 %v519, 2147483648
      %v567 = vor.u32 1.1754944e-38, %v566
      %v568 = vsel %vm565, %v567, %v563
      %v569 = vmul.f32 1.0, %v568
      %v570 = vrcp.pop %v520
      %v571 = vmul.f32 %v520, %v570
      %v572 = vsub.f32 1.0, %v571
      %v573 = vmul.f32 %v570, %v572
      %v574 = vadd.f32 %v570, %v573
      %vm575 = vweird.f32 %v520
      %vm576 = vweird.f32 %v570
      %vm577 = vmor %vm575, %vm576
      %v578 = vsel %vm577, %v570, %v574
      %v579 = vand.u32 2147483647, %v520
      %vm580 = vcmp.eq.f32.partialorder %v579, 8.507059e+37
      %v581 = vand.u32 %v520, 2147483648
      %v582 = vor.u32 1.1754944e-38, %v581
      %v583 = vsel %vm580, %v582, %v578
      %v584 = vmul.f32 1.0, %v583
      %v585 = vrcp.pop %v521
      %v586 = vmul.f32 %v521, %v585
      %v587 = vsub.f32 1.0, %v586
      %v588 = vmul.f32 %v585, %v587
      %v589 = vadd.f32 %v585, %v588
      %vm590 = vweird.f32 %v521
      %vm591 = vweird.f32 %v585
      %vm592 = vmor %vm590, %vm591
      %v593 = vsel %vm592, %v585, %v589
      %v594 = vand.u32 2147483647, %v521
      %vm595 = vcmp.eq.f32.partialorder %v594, 8.507059e+37
      %v596 = vand.u32 %v521, 2147483648
      %v597 = vor.u32 1.1754944e-38, %v596
      %v598 = vsel %vm595, %v597, %v593
      %v599 = vmul.f32 1.0, %v598
      %v600 = vrcp.pop %v522
      %v601 = vmul.f32 %v522, %v600
      %v602 = vsub.f32 1.0, %v601
      %v603 = vmul.f32 %v600, %v602
      %v604 = vadd.f32 %v600, %v603
      %vm605 = vweird.f32 %v522
      %vm606 = vweird.f32 %v600
      %vm607 = vmor %vm605, %vm606
      %v608 = vsel %vm607, %v600, %v604
      %v609 = vand.u32 2147483647, %v522
      %vm610 = vcmp.eq.f32.partialorder %v609, 8.507059e+37
      %v611 = vand.u32 %v522, 2147483648
      %v612 = vor.u32 1.1754944e-38, %v611
      %v613 = vsel %vm610, %v612, %v608
      %v614 = vmul.f32 1.0, %v613
      %v615 = vrcp.pop %v523
      %v616 = vmul.f32 %v523, %v615
      %v617 = vsub.f32 1.0, %v616
      %v618 = vmul.f32 %v615, %v617
      %v619 = vadd.f32 %v615, %v618
      %vm620 = vweird.f32 %v523
      %vm621 = vweird.f32 %v615
      %vm622 = vmor %vm620, %vm621
      %v623 = vsel %vm622, %v615, %v619
      %v624 = vand.u32 2147483647, %v523
      %vm625 = vcmp.eq.f32.partialorder %v624, 8.507059e+37
      %v626 = vand.u32 %v523, 2147483648
      %v627 = vor.u32 1.1754944e-38, %v626
      %v628 = vsel %vm625, %v627, %v623
      %v629 = vmul.f32 1.0, %v628
      %v630 = vrcp.pop %v524
      %v631 = vmul.f32 %v524, %v630
      %v632 = vsub.f32 1.0, %v631
      %v633 = vmul.f32 %v630, %v632
      %v634 = vadd.f32 %v630, %v633
      %vm635 = vweird.f32 %v524
      %vm636 = vweird.f32 %v630
      %vm637 = vmor %vm635, %vm636
      %v638 = vsel %vm637, %v630, %v634
      %v639 = vand.u32 2147483647, %v524
      %vm640 = vcmp.eq.f32.partialorder %v639, 8.507059e+37
      %v641 = vand.u32 %v524, 2147483648
      %v642 = vor.u32 1.1754944e-38, %v641
      %v643 = vsel %vm640, %v642, %v638
      %v644 = vmul.f32 1.0, %v643
      %v645 = vmul.f32 %v470, %v539
      %v646 = vmul.f32 %v473, %v554
      %v647 = vmul.f32 %v476, %v569
      %v648 = vmul.f32 %v479, %v584
      %v649 = vmul.f32 %v482, %v599
      %v650 = vmul.f32 %v485, %v614
      %v651 = vmul.f32 %v488, %v629
      %v652 = vmul.f32 %v491, %v644
      %v662 = vrot.slane 0.0, 7
      %v663 = vrot.slane %v645, 7
      %v664 = vrot.slane %v646, 7
      %v665 = vrot.slane %v647, 7
      %v666 = vrot.slane %v648, 7
      %v667 = vrot.slane %v649, 7
      %v668 = vrot.slane %v650, 7
      %v669 = vrot.slane %v651, 7
      %v670 = vrot.slane %v652, 7
      %vm680 = vcmask 1040384
      %v681 = vsel %vm680, 0.0, %v662
      %v682 = vsel %vm680, 0.0, %v663
      %v683 = vsel %vm680, 0.0, %v664
      %v684 = vsel %vm680, 0.0, %v665
      %v685 = vsel %vm680, 0.0, %v666
      %v686 = vsel %vm680, 0.0, %v667
      %v687 = vsel %vm680, 0.0, %v668
      %v688 = vsel %vm680, 0.0, %v669
      %v689 = vsel %vm680, 0.0, %v670
      %v690 = vsel %vm680, %v662, 0.0
      %v691 = vsel %vm680, %v663, 0.0
      %v692 = vsel %vm680, %v664, 0.0
      %v693 = vsel %vm680, %v665, 0.0
      %v694 = vsel %vm680, %v666, 0.0
      %v695 = vsel %vm680, %v667, 0.0
      %v696 = vsel %vm680, %v668, 0.0
      %v697 = vsel %vm680, %v669, 0.0
      %v698 = vsel %vm680, %v670, 0.0
      %vm715 = vcmask 1046528
      %v716 = vrot.slane %v681, 1
      %v717 = vrot.slane %v690, 1
      %v718 = vsel %vm715, %v716, %v717
      %v719 = vrot.slane %v682, 1
      %v720 = vrot.slane %v691, 1
      %v721 = vsel %vm715, %v719, %v720
      %v722 = vrot.slane %v683, 1
      %v723 = vrot.slane %v692, 1
      %v724 = vsel %vm715, %v722, %v723
      %v725 = vrot.slane %v684, 1
      %v726 = vrot.slane %v693, 1
      %v727 = vsel %vm715, %v725, %v726
      %v728 = vrot.slane %v685, 1
      %v729 = vrot.slane %v694, 1
      %v730 = vsel %vm715, %v728, %v729
      %v731 = vrot.slane %v686, 1
      %v732 = vrot.slane %v695, 1
      %v733 = vsel %vm715, %v731, %v732
      %v734 = vrot.slane %v687, 1
      %v735 = vrot.slane %v696, 1
      %v736 = vsel %vm715, %v734, %v735
      %v737 = vrot.slane %v688, 1
      %v738 = vrot.slane %v697, 1
      %v739 = vsel %vm715, %v737, %v738
      %vm740 = vcmask 1045504
      %v741 = vrot.slane %v681, 2
      %v742 = vrot.slane %v690, 2
      %v743 = vsel %vm740, %v741, %v742
      %v744 = vrot.slane %v682, 2
      %v745 = vrot.slane %v691, 2
      %v746 = vsel %vm740, %v744, %v745
      %v747 = vrot.slane %v683, 2
      %v748 = vrot.slane %v692, 2
      %v749 = vsel %vm740, %v747, %v748
      %v750 = vrot.slane %v684, 2
      %v751 = vrot.slane %v693, 2
      %v752 = vsel %vm740, %v750, %v751
      %v753 = vrot.slane %v685, 2
      %v754 = vrot.slane %v694, 2
      %v755 = vsel %vm740, %v753, %v754
      %v756 = vrot.slane %v686, 2
      %v757 = vrot.slane %v695, 2
      %v758 = vsel %vm740, %v756, %v757
      %v759 = vrot.slane %v687, 2
      %v760 = vrot.slane %v696, 2
      %v761 = vsel %vm740, %v759, %v760
      %v762 = vrot.slane %v688, 2
      %v763 = vrot.slane %v697, 2
      %v764 = vsel %vm740, %v762, %v763
      %v767 = vrot.slane %v689, 1
      %v768 = vrot.slane %v698, 1
      %v769 = vsel %vm715, %v767, %v768
      %v770 = vrot.slane %v689, 2
      %v771 = vrot.slane %v698, 2
      %v772 = vsel %vm740, %v770, %v771
      %773 = vrot.lane.b32.xlu0 %v718, 8
      %v774 = vpop.permute.xlu0 %773
      %775 = vrot.lane.b32.xlu0 %v721, 8
      %v776 = vpop.permute.xlu0 %775
      %777 = vrot.lane.b32.xlu0 %v724, 8
      %v778 = vpop.permute.xlu0 %777
      %779 = vrot.lane.b32.xlu0 %v727, 8
      %v780 = vpop.permute.xlu0 %779
      %781 = vrot.lane.b32.xlu0 %v730, 8
      %v782 = vpop.permute.xlu0 %781
      %783 = vrot.lane.b32.xlu0 %v733, 8
      %v784 = vpop.permute.xlu0 %783
      %785 = vrot.lane.b32.xlu0 %v736, 8
      %v786 = vpop.permute.xlu0 %785
      %787 = vrot.lane.b32.xlu0 %v739, 8
      %v788 = vpop.permute.xlu0 %787
      %797 = vrot.lane.b32.xlu0 %v743, 16
      %v798 = vpop.permute.xlu0 %797
      %799 = vrot.lane.b32.xlu0 %v746, 16
      %v800 = vpop.permute.xlu0 %799
      %801 = vrot.lane.b32.xlu0 %v749, 16
      %v802 = vpop.permute.xlu0 %801
      %803 = vrot.lane.b32.xlu0 %v752, 16
      %v804 = vpop.permute.xlu0 %803
      %805 = vrot.lane.b32.xlu0 %v755, 16
      %v806 = vpop.permute.xlu0 %805
      %807 = vrot.lane.b32.xlu0 %v758, 16
      %v808 = vpop.permute.xlu0 %807
      %809 = vrot.lane.b32.xlu0 %v761, 16
      %v810 = vpop.permute.xlu0 %809
      %811 = vrot.lane.b32.xlu0 %v764, 16
      %v812 = vpop.permute.xlu0 %811
      %821 = vrot.lane.b32.xlu0 %v682, 24
      %v822 = vpop.permute.xlu0 %821
      %823 = vrot.lane.b32.xlu0 %v683, 24
      %v824 = vpop.permute.xlu0 %823
      %825 = vrot.lane.b32.xlu0 %v684, 24
      %v826 = vpop.permute.xlu0 %825
      %827 = vrot.lane.b32.xlu0 %v685, 24
      %v828 = vpop.permute.xlu0 %827
      %829 = vrot.lane.b32.xlu0 %v686, 24
      %v830 = vpop.permute.xlu0 %829
      %831 = vrot.lane.b32.xlu0 %v687, 24
      %v832 = vpop.permute.xlu0 %831
      %833 = vrot.lane.b32.xlu0 %v688, 24
      %v834 = vpop.permute.xlu0 %833
      %835 = vrot.lane.b32.xlu0 %v689, 24
      %v836 = vpop.permute.xlu0 %835
      %845 = vrot.lane.b32.xlu0 %v721, 32
      %v846 = vpop.permute.xlu0 %845
      %847 = vrot.lane.b32.xlu0 %v724, 32
      %v848 = vpop.permute.xlu0 %847
      %849 = vrot.lane.b32.xlu0 %v727, 32
      %v850 = vpop.permute.xlu0 %849
      %851 = vrot.lane.b32.xlu0 %v730, 32
      %v852 = vpop.permute.xlu0 %851
      %853 = vrot.lane.b32.xlu0 %v733, 32
      %v854 = vpop.permute.xlu0 %853
      %855 = vrot.lane.b32.xlu0 %v736, 32
      %v856 = vpop.permute.xlu0 %855
      %857 = vrot.lane.b32.xlu0 %v739, 32
      %v858 = vpop.permute.xlu0 %857
      %859 = vrot.lane.b32.xlu0 %v769, 32
      %v860 = vpop.permute.xlu0 %859
      %869 = vrot.lane.b32.xlu0 %v746, 40
      %v870 = vpop.permute.xlu0 %869
      %871 = vrot.lane.b32.xlu0 %v749, 40
      %v872 = vpop.permute.xlu0 %871
      %873 = vrot.lane.b32.xlu0 %v752, 40
      %v874 = vpop.permute.xlu0 %873
      %875 = vrot.lane.b32.xlu0 %v755, 40
      %v876 = vpop.permute.xlu0 %875
      %877 = vrot.lane.b32.xlu0 %v758, 40
      %v878 = vpop.permute.xlu0 %877
      %879 = vrot.lane.b32.xlu0 %v761, 40
      %v880 = vpop.permute.xlu0 %879
      %881 = vrot.lane.b32.xlu0 %v764, 40
      %v882 = vpop.permute.xlu0 %881
      %883 = vrot.lane.b32.xlu0 %v772, 40
      %v884 = vpop.permute.xlu0 %883
      %893 = vrot.lane.b32.xlu0 %v683, 48
      %v894 = vpop.permute.xlu0 %893
      %895 = vrot.lane.b32.xlu0 %v684, 48
      %v896 = vpop.permute.xlu0 %895
      %897 = vrot.lane.b32.xlu0 %v685, 48
      %v898 = vpop.permute.xlu0 %897
      %899 = vrot.lane.b32.xlu0 %v686, 48
      %v900 = vpop.permute.xlu0 %899
      %901 = vrot.lane.b32.xlu0 %v687, 48
      %v902 = vpop.permute.xlu0 %901
      %903 = vrot.lane.b32.xlu0 %v688, 48
      %v904 = vpop.permute.xlu0 %903
      %905 = vrot.lane.b32.xlu0 %v689, 48
      %v906 = vpop.permute.xlu0 %905
      %907 = vrot.lane.b32.xlu0 %v681, 48
      %v908 = vpop.permute.xlu0 %907
      %917 = vrot.lane.b32.xlu0 %v724, 56
      %v918 = vpop.permute.xlu0 %917
      %919 = vrot.lane.b32.xlu0 %v727, 56
      %v920 = vpop.permute.xlu0 %919
      %921 = vrot.lane.b32.xlu0 %v730, 56
      %v922 = vpop.permute.xlu0 %921
      %923 = vrot.lane.b32.xlu0 %v733, 56
      %v924 = vpop.permute.xlu0 %923
      %925 = vrot.lane.b32.xlu0 %v736, 56
      %v926 = vpop.permute.xlu0 %925
      %927 = vrot.lane.b32.xlu0 %v739, 56
      %v928 = vpop.permute.xlu0 %927
      %929 = vrot.lane.b32.xlu0 %v769, 56
      %v930 = vpop.permute.xlu0 %929
      %931 = vrot.lane.b32.xlu0 %v718, 56
      %v932 = vpop.permute.xlu0 %931
      %941 = vrot.lane.b32.xlu0 %v749, 64
      %v942 = vpop.permute.xlu0 %941
      %943 = vrot.lane.b32.xlu0 %v752, 64
      %v944 = vpop.permute.xlu0 %943
      %945 = vrot.lane.b32.xlu0 %v755, 64
      %v946 = vpop.permute.xlu0 %945
      %947 = vrot.lane.b32.xlu0 %v758, 64
      %v948 = vpop.permute.xlu0 %947
      %949 = vrot.lane.b32.xlu0 %v761, 64
      %v950 = vpop.permute.xlu0 %949
      %951 = vrot.lane.b32.xlu0 %v764, 64
      %v952 = vpop.permute.xlu0 %951
      %953 = vrot.lane.b32.xlu0 %v772, 64
      %v954 = vpop.permute.xlu0 %953
      %955 = vrot.lane.b32.xlu0 %v743, 64
      %v956 = vpop.permute.xlu0 %955
      %v965 = vsel %vm427, %v681, %v774
      %v966 = vsel %vm427, %v682, %v776
      %v967 = vsel %vm427, %v683, %v778
      %v968 = vsel %vm427, %v684, %v780
      %v969 = vsel %vm427, %v685, %v782
      %v970 = vsel %vm427, %v686, %v784
      %v971 = vsel %vm427, %v687, %v786
      %v972 = vsel %vm427, %v688, %v788
      %vm973 = vcmask 130048
      %v974 = vsel %vm973, %v965, %v798
      %v975 = vsel %vm973, %v966, %v800
      %v976 = vsel %vm973, %v967, %v802
      %v977 = vsel %vm973, %v968, %v804
      %v978 = vsel %vm973, %v969, %v806
      %v979 = vsel %vm973, %v970, %v808
      %v980 = vsel %vm973, %v971, %v810
      %v981 = vsel %vm973, %v972, %v812
      %vm982 = vcmask 195584
      %v983 = vsel %vm982, %v974, %v822
      %v984 = vsel %vm982, %v975, %v824
      %v985 = vsel %vm982, %v976, %v826
      %v986 = vsel %vm982, %v977, %v828
      %v987 = vsel %vm982, %v978, %v830
      %v988 = vsel %vm982, %v979, %v832
      %v989 = vsel %vm982, %v980, %v834
      %v990 = vsel %vm982, %v981, %v836
      %vm991 = vcmask 261120
      %v992 = vsel %vm991, %v983, %v846
      %v993 = vsel %vm991, %v984, %v848
      %v994 = vsel %vm991, %v985, %v850
      %v995 = vsel %vm991, %v986, %v852
      %v996 = vsel %vm991, %v987, %v854
      %v997 = vsel %vm991, %v988, %v856
      %v998 = vsel %vm991, %v989, %v858
      %v999 = vsel %vm991, %v990, %v860
      %vm1000 = vcmask 326656
      %v1001 = vsel %vm1000, %v992, %v870
      %v1002 = vsel %vm1000, %v993, %v872
      %v1003 = vsel %vm1000, %v994, %v874
      %v1004 = vsel %vm1000, %v995, %v876
      %v1005 = vsel %vm1000, %v996, %v878
      %v1006 = vsel %vm1000, %v997, %v880
      %v1007 = vsel %vm1000, %v998, %v882
      %v1008 = vsel %vm1000, %v999, %v884
      %vm1009 = vcmask 392192
      %v1010 = vsel %vm1009, %v1001, %v894
      %v1011 = vsel %vm1009, %v1002, %v896
      %v1012 = vsel %vm1009, %v1003, %v898
      %v1013 = vsel %vm1009, %v1004, %v900
      %v1014 = vsel %vm1009, %v1005, %v902
      %v1015 = vsel %vm1009, %v1006, %v904
      %v1016 = vsel %vm1009, %v1007, %v906
      %v1017 = vsel %vm1009, %v1008, %v908
      %vm1018 = vcmask 457728
      %v1019 = vsel %vm1018, %v1010, %v918
      %v1020 = vsel %vm1018, %v1011, %v920
      %v1021 = vsel %vm1018, %v1012, %v922
      %v1022 = vsel %vm1018, %v1013, %v924
      %v1023 = vsel %vm1018, %v1014, %v926
      %v1024 = vsel %vm1018, %v1015, %v928
      %v1025 = vsel %vm1018, %v1016, %v930
      %v1026 = vsel %vm1018, %v1017, %v932
      %vm1027 = vcmask 523264
      %v1028 = vsel %vm1027, %v1019, %v942
      %v1029 = vsel %vm1027, %v1020, %v944
      %v1030 = vsel %vm1027, %v1021, %v946
      %v1031 = vsel %vm1027, %v1022, %v948
      %v1032 = vsel %vm1027, %v1023, %v950
      %v1033 = vsel %vm1027, %v1024, %v952
      %v1034 = vsel %vm1027, %v1025, %v954
      %v1035 = vsel %vm1027, %v1026, %v956
      %v1036 = vld [vmem:[%s3] sm:$0xff]
      %v1037 = vld [vmem:[%s3 + $0x8] sm:$0xff]
      %v1038 = vld [vmem:[%s3 + $0x10] sm:$0xff]
      %v1039 = vld [vmem:[%s3 + $0x18] sm:$0xff]
      %v1040 = vld [vmem:[%s3 + $0x20] sm:$0xff]
      %v1041 = vld [vmem:[%s3 + $0x28] sm:$0xff]
      %v1042 = vld [vmem:[%s3 + $0x30] sm:$0xff]
      %v1043 = vld [vmem:[%s3 + $0x38] sm:$0xff]
      %v1044 = vld [vmem:[%s3 + $0x40] sm:$0xff]
      %v1045 = vld [vmem:[%s4] sm:$0x1]
      %v1047 = vperm.slane %v1045, 0
      %vm1049 = vcmask 588800
      %v1051 = vsel %vm1049, %v1028, 0
      %v1054 = vsel %vm1049, %v1029, 0
      %v1057 = vsel %vm1049, %v1030, 0
      %v1060 = vsel %vm1049, %v1031, 0
      %v1063 = vsel %vm1049, %v1032, 0
      %v1066 = vsel %vm1049, %v1033, 0
      %v1069 = vsel %vm1049, %v1034, 0
      %v1072 = vsel %vm1049, %v1035, 0
      %1074 = vmatpush.msra.mxu0 0.0
      %1075 = vmatpush.msra.mxu0 0.0
      %1076 = vmatpush.msra.mxu0 0.0
      %1077 = vmatpush.msra.mxu0 0.0
      %1078 = vmatpush.msra.mxu0 0.0
      %1079 = vmatpush.msra.mxu0 0.0
      %1080 = vmatpush.msra.mxu0 0.0
      %1081 = vmatpush.msra.mxu0 %v1044
      %1082 = vmatpush.msra.mxu0 %v1043
      %1083 = vmatpush.msra.mxu0 %v1042
      %1084 = vmatpush.msra.mxu0 %v1041
      %1085 = vmatpush.msra.mxu0 %v1040
      %1086 = vmatpush.msra.mxu0 %v1039
      %1087 = vmatpush.msra.mxu0 %v1038
      %1088 = vmatpush.msra.mxu0 %v1037
      %1089 = vmatpush.msra.mxu0 %v1036
      %1090 = vmatmul.f32.gmra.mxu0 %v1051
      %v1091 = vpop.f32.mrf.mxu0
      %v1092 = vadd.f32 %v1047, %v1091
      %1093 = vmatmul.f32.gmra.mxu0 %v1054
      %v1094 = vpop.f32.mrf.mxu0
      %v1095 = vadd.f32 %v1047, %v1094
      %1096 = vmatmul.f32.gmra.mxu0 %v1057
      %v1097 = vpop.f32.mrf.mxu0
      %v1098 = vadd.f32 %v1047, %v1097
      %1099 = vmatmul.f32.gmra.mxu0 %v1060
      %v1100 = vpop.f32.mrf.mxu0
      %v1101 = vadd.f32 %v1047, %v1100
      %1102 = vmatmul.f32.gmra.mxu0 %v1063
      %v1103 = vpop.f32.mrf.mxu0
      %v1104 = vadd.f32 %v1047, %v1103
      %1105 = vmatmul.f32.gmra.mxu0 %v1066
      %v1106 = vpop.f32.mrf.mxu0
      %v1107 = vadd.f32 %v1047, %v1106
      %1108 = vmatmul.f32.gmra.mxu0 %v1069
      %v1109 = vpop.f32.mrf.mxu0
      %v1110 = vadd.f32 %v1047, %v1109
      %1111 = vmatmul.f32.gmra.mxu0 %v1072
      %v1112 = vpop.f32.mrf.mxu0
      %v1113 = vadd.f32 %v1047, %v1112
      %1114 = vdwg.mxu0
      %v1115 = vmax.f32 %v1092, 0.0
      %v1116 = vmax.f32 %v1095, 0.0
      %v1117 = vmax.f32 %v1098, 0.0
      %v1118 = vmax.f32 %v1101, 0.0
      %v1119 = vmax.f32 %v1104, 0.0
      %v1120 = vmax.f32 %v1107, 0.0
      %v1121 = vmax.f32 %v1110, 0.0
      %v1122 = vmax.f32 %v1113, 0.0
      %v1123 = vld [vmem:[%s5] sm:$0xff]
      %v1124 = vld [vmem:[%s6] sm:$0x1]
      %v1126 = vperm.slane %v1124, 0
      %v1128 = vsel %vm427, %v645, 0
      %v1130 = vsel %vm427, %v646, 0
      %v1132 = vsel %vm427, %v647, 0
      %v1134 = vsel %vm427, %v648, 0
      %v1136 = vsel %vm427, %v649, 0
      %v1138 = vsel %vm427, %v650, 0
      %v1140 = vsel %vm427, %v651, 0
      %v1142 = vsel %vm427, %v652, 0
      %1144 = vmatpush.msra.mxu0 0.0
      %1145 = vmatpush.msra.mxu0 0.0
      %1146 = vmatpush.msra.mxu0 0.0
      %1147 = vmatpush.msra.mxu0 0.0
      %1148 = vmatpush.msra.mxu0 0.0
      %1149 = vmatpush.msra.mxu0 0.0
      %1150 = vmatpush.msra.mxu0 0.0
      %1151 = vmatpush.msra.mxu0 0.0
      %1152 = vmatpush.msra.mxu0 0.0
      %1153 = vmatpush.msra.mxu0 0.0
      %1154 = vmatpush.msra.mxu0 0.0
      %1155 = vmatpush.msra.mxu0 0.0
      %1156 = vmatpush.msra.mxu0 0.0
      %1157 = vmatpush.msra.mxu0 0.0
      %1158 = vmatpush.msra.mxu0 0.0
      %1159 = vmatpush.msra.mxu0 %v1123
      %1160 = vmatmul.f32.gmra.mxu0 %v1128
      %v1161 = vpop.f32.mrf.mxu0
      %v1162 = vadd.f32 %v1126, %v1161
      %1163 = vmatmul.f32.gmra.mxu0 %v1130
      %v1164 = vpop.f32.mrf.mxu0
      %v1165 = vadd.f32 %v1126, %v1164
      %1166 = vmatmul.f32.gmra.mxu0 %v1132
      %v1167 = vpop.f32.mrf.mxu0
      %v1168 = vadd.f32 %v1126, %v1167
      %1169 = vmatmul.f32.gmra.mxu0 %v1134
      %v1170 = vpop.f32.mrf.mxu0
      %v1171 = vadd.f32 %v1126, %v1170
      %1172 = vmatmul.f32.gmra.mxu0 %v1136
      %v1173 = vpop.f32.mrf.mxu0
      %v1174 = vadd.f32 %v1126, %v1173
      %1175 = vmatmul.f32.gmra.mxu0 %v1138
      %v1176 = vpop.f32.mrf.mxu0
      %v1177 = vadd.f32 %v1126, %v1176
      %1178 = vmatmul.f32.gmra.mxu0 %v1140
      %v1179 = vpop.f32.mrf.mxu0
      %v1180 = vadd.f32 %v1126, %v1179
      %1181 = vmatmul.f32.gmra.mxu0 %v1142
      %v1182 = vpop.f32.mrf.mxu0
      %v1183 = vadd.f32 %v1126, %v1182
      %1184 = vdwg.mxu0
      %v1185 = vld [vmem:[%s7] sm:$0xff]
      %v1186 = vld [vmem:[%s8] sm:$0xff]
      %1187 = vmatpush.msra.mxu0 0.0
      %1188 = vmatpush.msra.mxu0 0.0
      %1189 = vmatpush.msra.mxu0 0.0
      %1190 = vmatpush.msra.mxu0 0.0
      %1191 = vmatpush.msra.mxu0 0.0
      %1192 = vmatpush.msra.mxu0 0.0
      %1193 = vmatpush.msra.mxu0 0.0
      %1194 = vmatpush.msra.mxu0 0.0
      %1195 = vmatpush.msra.mxu0 0.0
      %1196 = vmatpush.msra.mxu0 0.0
      %1197 = vmatpush.msra.mxu0 0.0
      %1198 = vmatpush.msra.mxu0 0.0
      %1199 = vmatpush.msra.mxu0 0.0
      %1200 = vmatpush.msra.mxu0 0.0
      %1201 = vmatpush.msra.mxu0 0.0
      %1202 = vmatpush.msra.mxu0 %v1186
      %1203 = vmatmul.f32.gmra.mxu0 %v1128
      %v1204 = vpop.f32.mrf.mxu0
      %v1205 = vadd.f32 0.0, %v1204
      %1206 = vmatmul.f32.gmra.mxu0 %v1130
      %v1207 = vpop.f32.mrf.mxu0
      %v1208 = vadd.f32 0.0, %v1207
      %1209 = vmatmul.f32.gmra.mxu0 %v1132
      %v1210 = vpop.f32.mrf.mxu0
      %v1211 = vadd.f32 0.0, %v1210
      %1212 = vmatmul.f32.gmra.mxu0 %v1134
      %v1213 = vpop.f32.mrf.mxu0
      %v1214 = vadd.f32 0.0, %v1213
      %1215 = vmatmul.f32.gmra.mxu0 %v1136
      %v1216 = vpop.f32.mrf.mxu0
      %v1217 = vadd.f32 0.0, %v1216
      %1218 = vmatmul.f32.gmra.mxu0 %v1138
      %v1219 = vpop.f32.mrf.mxu0
      %v1220 = vadd.f32 0.0, %v1219
      %1221 = vmatmul.f32.gmra.mxu0 %v1140
      %v1222 = vpop.f32.mrf.mxu0
      %v1223 = vadd.f32 0.0, %v1222
      %1224 = vmatmul.f32.gmra.mxu0 %v1142
      %v1225 = vpop.f32.mrf.mxu0
      %v1226 = vadd.f32 0.0, %v1225
      %1227 = vdwg.mxu0
      %v1229 = vsel %vm427, %v1115, 0
      %v1232 = vsel %vm427, %v1116, 0
      %v1235 = vsel %vm427, %v1117, 0
      %v1238 = vsel %vm427, %v1118, 0
      %v1241 = vsel %vm427, %v1119, 0
      %v1244 = vsel %vm427, %v1120, 0
      %v1247 = vsel %vm427, %v1121, 0
      %v1250 = vsel %vm427, %v1122, 0
      %1252 = vmatpush.msra.mxu0 0.0
      %1253 = vmatpush.msra.mxu0 0.0
      %1254 = vmatpush.msra.mxu0 0.0
      %1255 = vmatpush.msra.mxu0 0.0
      %1256 = vmatpush.msra.mxu0 0.0
      %1257 = vmatpush.msra.mxu0 0.0
      %1258 = vmatpush.msra.mxu0 0.0
      %1259 = vmatpush.msra.mxu0 0.0
      %1260 = vmatpush.msra.mxu0 0.0
      %1261 = vmatpush.msra.mxu0 0.0
      %1262 = vmatpush.msra.mxu0 0.0
      %1263 = vmatpush.msra.mxu0 0.0
      %1264 = vmatpush.msra.mxu0 0.0
      %1265 = vmatpush.msra.mxu0 0.0
      %1266 = vmatpush.msra.mxu0 0.0
      %1267 = vmatpush.msra.mxu0 %v1185
      %1268 = vmatmul.f32.gmra.mxu0 %v1229
      %v1269 = vpop.f32.mrf.mxu0
      %v1270 = vadd.f32 %v1205, %v1269
      %1271 = vmatmul.f32.gmra.mxu0 %v1232
      %v1272 = vpop.f32.mrf.mxu0
      %v1273 = vadd.f32 %v1208, %v1272
      %1274 = vmatmul.f32.gmra.mxu0 %v1235
      %v1275 = vpop.f32.mrf.mxu0
      %v1276 = vadd.f32 %v1211, %v1275
      %1277 = vmatmul.f32.gmra.mxu0 %v1238
      %v1278 = vpop.f32.mrf.mxu0
      %v1279 = vadd.f32 %v1214, %v1278
      %1280 = vmatmul.f32.gmra.mxu0 %v1241
      %v1281 = vpop.f32.mrf.mxu0
      %v1282 = vadd.f32 %v1217, %v1281
      %1283 = vmatmul.f32.gmra.mxu0 %v1244
      %v1284 = vpop.f32.mrf.mxu0
      %v1285 = vadd.f32 %v1220, %v1284
      %1286 = vmatmul.f32.gmra.mxu0 %v1247
      %v1287 = vpop.f32.mrf.mxu0
      %v1288 = vadd.f32 %v1223, %v1287
      %1289 = vmatmul.f32.gmra.mxu0 %v1250
      %v1290 = vpop.f32.mrf.mxu0
      %v1291 = vadd.f32 %v1226, %v1290
      %1292 = vdwg.mxu0
      %v1293 = vld [vmem:[%s9] sm:$0x1]
      %v1295 = vperm.slane %v1293, 0
      %v1297 = vadd.f32 %v1270, %v1295
      %v1298 = vadd.f32 %v1273, %v1295
      %v1299 = vadd.f32 %v1276, %v1295
      %v1300 = vadd.f32 %v1279, %v1295
      %v1301 = vadd.f32 %v1282, %v1295
      %v1302 = vadd.f32 %v1285, %v1295
      %v1303 = vadd.f32 %v1288, %v1295
      %v1304 = vadd.f32 %v1291, %v1295
      %v1305 = vmax.f32 %v1297, 0.0
      %v1306 = vmax.f32 %v1298, 0.0
      %v1307 = vmax.f32 %v1299, 0.0
      %v1308 = vmax.f32 %v1300, 0.0
      %v1309 = vmax.f32 %v1301, 0.0
      %v1310 = vmax.f32 %v1302, 0.0
      %v1311 = vmax.f32 %v1303, 0.0
      %v1312 = vmax.f32 %v1304, 0.0
      %v1313 = vld [vmem:[%s10] sm:$0xf]
      %v1314 = vld [vmem:[%s11] sm:$0x1]
      %v1316 = vperm.slane %v1314, 0
      %vm1318 = vcmask 31744
      %v1320 = vsel %vm1318, %v1305, 0
      %v1323 = vsel %vm1318, %v1306, 0
      %v1326 = vsel %vm1318, %v1307, 0
      %v1329 = vsel %vm1318, %v1308, 0
      %v1332 = vsel %vm1318, %v1309, 0
      %v1335 = vsel %vm1318, %v1310, 0
      %v1338 = vsel %vm1318, %v1311, 0
      %v1341 = vsel %vm1318, %v1312, 0
      %vm1343 = vcmask 1043456
      %v1345 = vsel %vm1343, %v1313, 0
      %1347 = vmatpush.msra.mxu0 0.0
      %1348 = vmatpush.msra.mxu0 0.0
      %1349 = vmatpush.msra.mxu0 0.0
      %1350 = vmatpush.msra.mxu0 0.0
      %1351 = vmatpush.msra.mxu0 0.0
      %1352 = vmatpush.msra.mxu0 0.0
      %1353 = vmatpush.msra.mxu0 0.0
      %1354 = vmatpush.msra.mxu0 0.0
      %1355 = vmatpush.msra.mxu0 0.0
      %1356 = vmatpush.msra.mxu0 0.0
      %1357 = vmatpush.msra.mxu0 0.0
      %1358 = vmatpush.msra.mxu0 0.0
      %1359 = vmatpush.msra.mxu0 0.0
      %1360 = vmatpush.msra.mxu0 0.0
      %1361 = vmatpush.msra.mxu0 0.0
      %1362 = vmatpush.msra.mxu0 %v1345
      %1363 = vmatmul.f32.gmra.mxu0 %v1320
      %v1364 = vpop.f32.mrf.mxu0
      %v1365 = vadd.f32 %v1316, %v1364
      %1366 = vmatmul.f32.gmra.mxu0 %v1323
      %v1367 = vpop.f32.mrf.mxu0
      %v1368 = vadd.f32 %v1316, %v1367
      %1369 = vmatmul.f32.gmra.mxu0 %v1326
      %v1370 = vpop.f32.mrf.mxu0
      %v1371 = vadd.f32 %v1316, %v1370
      %1372 = vmatmul.f32.gmra.mxu0 %v1329
      %v1373 = vpop.f32.mrf.mxu0
      %v1374 = vadd.f32 %v1316, %v1373
      %1375 = vmatmul.f32.gmra.mxu0 %v1332
      %v1376 = vpop.f32.mrf.mxu0
      %v1377 = vadd.f32 %v1316, %v1376
      %1378 = vmatmul.f32.gmra.mxu0 %v1335
      %v1379 = vpop.f32.mrf.mxu0
      %v1380 = vadd.f32 %v1316, %v1379
      %1381 = vmatmul.f32.gmra.mxu0 %v1338
      %v1382 = vpop.f32.mrf.mxu0
      %v1383 = vadd.f32 %v1316, %v1382
      %1384 = vmatmul.f32.gmra.mxu0 %v1341
      %v1385 = vpop.f32.mrf.mxu0
      %v1386 = vadd.f32 %v1316, %v1385
      %1387 = vdwg.mxu0
      %v1388 = vsel %vm427, %v1365, -inf
      %v1389 = vsel %vm427, %v1368, -inf
      %v1390 = vsel %vm427, %v1371, -inf
      %v1391 = vsel %vm427, %v1374, -inf
      %v1392 = vsel %vm427, %v1377, -inf
      %v1393 = vmax.f32 %v1388, %v1392
      %v1394 = vsel %vm427, %v1380, -inf
      %v1395 = vmax.f32 %v1389, %v1394
      %v1396 = vsel %vm427, %v1383, -inf
      %v1397 = vmax.f32 %v1390, %v1396
      %v1398 = vsel %vm427, %v1386, -inf
      %v1399 = vmax.f32 %v1391, %v1398
      %v1400 = vmax.f32 %v1393, %v1395
      %v1401 = vmax.f32 %v1397, %v1399
      %v1402 = vmax.f32 %v1400, %v1401
      %v1403 = vrot.slane %v1402, 4
      %v1404 = vmax.f32 %v1402, %v1403
      %v1405 = vrot.slane %v1404, 2
      %v1406 = vmax.f32 %v1404, %v1405
      %v1407 = vrot.slane %v1406, 1
      %v1408 = vmax.f32 %v1406, %v1407
      %v1409 = vsub.f32 %v1365, %v1408
      %v1410 = vsub.f32 %v1368, %v1408
      %v1411 = vsub.f32 %v1371, %v1408
      %v1412 = vsub.f32 %v1374, %v1408
      %v1413 = vsub.f32 %v1377, %v1408
      %v1414 = vsub.f32 %v1380, %v1408
      %v1415 = vsub.f32 %v1383, %v1408
      %v1416 = vsub.f32 %v1386, %v1408
      %v1417 = vmul.f32 %v1409, 1.442695
      %v1418 = vpow.pop %v1417
      %v1419 = vmul.f32 %v1410, 1.442695
      %v1420 = vpow.pop %v1419
      %v1421 = vmul.f32 %v1411, 1.442695
      %v1422 = vpow.pop %v1421
      %v1423 = vmul.f32 %v1412, 1.442695
      %v1424 = vpow.pop %v1423
      %v1425 = vmul.f32 %v1413, 1.442695
      %v1426 = vpow.pop %v1425
      %v1427 = vmul.f32 %v1414, 1.442695
      %v1428 = vpow.pop %v1427
      %v1429 = vmul.f32 %v1415, 1.442695
      %v1430 = vpow.pop %v1429
      %v1431 = vmul.f32 %v1416, 1.442695
      %v1432 = vpow.pop %v1431
      %v1433 = vsel %vm427, %v1418, 0.0
      %v1434 = vsel %vm427, %v1420, 0.0
      %v1435 = vadd.f32 %v1433, %v1434
      %v1436 = vsel %vm427, %v1422, 0.0
      %v1437 = vadd.f32 %v1435, %v1436
      %v1438 = vsel %vm427, %v1424, 0.0
      %v1439 = vadd.f32 %v1437, %v1438
      %v1440 = vsel %vm427, %v1426, 0.0
      %v1441 = vadd.f32 %v1439, %v1440
      %v1442 = vsel %vm427, %v1428, 0.0
      %v1443 = vadd.f32 %v1441, %v1442
      %v1444 = vsel %vm427, %v1430, 0.0
      %v1445 = vadd.f32 %v1443, %v1444
      %v1446 = vsel %vm427, %v1432, 0.0
      %v1447 = vadd.f32 %v1445, %v1446
      %v1448 = vrot.slane %v1447, 4
      %v1449 = vadd.f32 %v1447, %v1448
      %v1450 = vrot.slane %v1449, 2
      %v1451 = vadd.f32 %v1449, %v1450
      %v1452 = vrot.slane %v1451, 1
      %v1453 = vadd.f32 %v1451, %v1452
      %v1454 = vrcp.pop %v1453
      %v1455 = vadd.f32 %v414, %v1115
      %v1456 = vadd.f32 %v415, %v1116
      %v1457 = vadd.f32 %v416, %v1117
      %v1458 = vadd.f32 %v417, %v1118
      %v1459 = vadd.f32 %v418, %v1119
      %v1460 = vadd.f32 %v419, %v1120
      %v1461 = vadd.f32 %v420, %v1121
      %v1462 = vadd.f32 %v421, %v1122
      %v1463 = vmul.f32 %v1418, %v1454
      %v1464 = vmul.f32 %v1420, %v1454
      %v1465 = vmul.f32 %v1422, %v1454
      %v1466 = vmul.f32 %v1424, %v1454
      %v1467 = vmul.f32 %v1426, %v1454
      %v1468 = vmul.f32 %v1428, %v1454
      %v1469 = vmul.f32 %v1430, %v1454
      %v1470 = vmul.f32 %v1432, %v1454
      %v1471 = vmul.f32 %v1463, %v1162
      %v1472 = vmul.f32 %v1464, %v1165
      %v1473 = vmul.f32 %v1465, %v1168
      %v1474 = vmul.f32 %v1466, %v1171
      %v1475 = vmul.f32 %v1467, %v1174
      %v1476 = vmul.f32 %v1468, %v1177
      %v1477 = vmul.f32 %v1469, %v1180
      %v1478 = vmul.f32 %v1470, %v1183
      %v1479 = vadd.f32 %v1455, %v1471
      %v1480 = vadd.f32 %v1456, %v1472
      %v1481 = vadd.f32 %v1457, %v1473
      %v1482 = vadd.f32 %v1458, %v1474
      %v1483 = vadd.f32 %v1459, %v1475
      %v1484 = vadd.f32 %v1460, %v1476
      %v1485 = vadd.f32 %v1461, %v1477
      %v1486 = vadd.f32 %v1462, %v1478
      %1487 = vst.msk [vmem:[%s413] sm:$0xff] %vm427, %v1479
      %1488 = vst.msk [vmem:[%s413 + $0x8] sm:$0xff] %vm427, %v1480
      %1489 = vst.msk [vmem:[%s413 + $0x10] sm:$0xff] %vm427, %v1481
      %1490 = vst.msk [vmem:[%s413 + $0x18] sm:$0xff] %vm427, %v1482
      %1491 = vst.msk [vmem:[%s413 + $0x20] sm:$0xff] %vm427, %v1483
      %1492 = vst.msk [vmem:[%s413 + $0x28] sm:$0xff] %vm427, %v1484
      %1493 = vst.msk [vmem:[%s413 + $0x30] sm:$0xff] %vm427, %v1485
      %1494 = vst.msk [vmem:[%s413 + $0x38] sm:$0xff] %vm427, %v1486
      %p1495 = scmp.lt.s32.totalorder %s23, 1
      %s1496 = scalar_select %p1495, %s23, 1
      %s1497 = smul.addr %s1496, 8
      %s1498 = smul.addr %s1497, 8
      %s1499 = scalar_lea.vmem %s12, %s1498
      // Predicated region
      $region69: #{cot3_forward.4} parent=67 // pred_check
        %p1500 = pneg %p298
      $region70: #{cot3_forward.4} parent=67 // pred_check_branch
        %1502 = sbr.rel (%p1500) target = $region72
      $region71: #{cot3_forward.4} parent=67 // pred_region
        _
      $region72: #{cot3_forward.4} parent=67 // pred_fallthru
        _
    $region68: #{cot3_forward.4} parent=5 // pred_fallthru
      _
    %p1503 = scmp.le.s32.totalorder 2, %s18
    // Predicated region
    $region73: #{cot3_forward.4} parent=5 // pred_check
      %p1504 = pneg %p1503
    $region74: #{cot3_forward.4} parent=5 // pred_check_branch
      %1506 = sbr.rel (%p1504) target = $region76
    $region75: #{cot3_forward.4} parent=5 // pred_region
      %s1507 = ssub.s32 %s18, 2
      // Predicated region
      $region77: #{cot3_forward.4} parent=75 // pred_check
        %p1508 = pneg %p304
      $region78: #{cot3_forward.4} parent=75 // pred_check_branch
        %1510 = sbr.rel (%p1508) target = $region80
      $region79: #{cot3_forward.4} parent=75 // pred_region
        %p1511 = scmp.lt.s32.totalorder %s24, 1
        %s1512 = scalar_select %p1511, %s24, 1
        %s1513 = smul.addr %s1512, 8
        %s1514 = smul.addr %s1513, 8
        %s1515 = scalar_lea.vmem %s12, %s1514
      $region80: #{cot3_forward.4} parent=75 // pred_fallthru
        _
    $region76: #{cot3_forward.4} parent=5 // pred_fallthru
      _
  $region6: #{cot3_forward.4} parent=0 // loop_footer
    %s22 = sadd.s32 1, %s18
  $region7: #{cot3_forward.4} parent=0 // loop_footer_branch
    %17 = sbr.rel target = $region3
  $region8: #{cot3_forward.4} parent=0 // loop_exit
    _

</llo_original>
